<compile_context>
chip_gen: v6e
topology: v6e:2x2x1
jax: 0.10.0
libtpu: 0.0.40
codegen_flags: <defaults>
</compile_context>

<pallas_src>
import jax
import jax.numpy as jnp
from jax.experimental import pallas as pl
from jax.experimental.pallas import tpu as pltpu


_TILE_M = 2048            # rows per grid step (multiple of 8 and 128)
_MIN_PALLAS_BATCH = 1024  # below this, launch overhead dominates -> plain XLA


def _linear_sigmoid_kernel(x_ref, w_ref, b_ref, o_ref):
    # x_ref: (TM, 9) VMEM, w_ref: (1, 9) VMEM, b_ref: (1,) SMEM, o_ref: (1, TM) VMEM
    x = x_ref[...]                      # (TM, 9) f32
    w = w_ref[...]                      # (1, 9)  f32
    # Contract the K=9 feature dim of both operands -> lane-dense (1, TM).
    z = jax.lax.dot_general(
        w, x,
        dimension_numbers=(((1,), (1,)), ((), ())),
        preferred_element_type=jnp.float32,
    )
    z = z + b_ref[0]                    # scalar bias from SMEM
    o_ref[...] = jax.nn.sigmoid(z).astype(o_ref.dtype)


def insurance_nn_4_forward(x, weight, bias, *, tile_m=_TILE_M):
    """x: (N, 9); weight: (1, 9) (PyTorch layout); bias: (1,). Returns (N,) f32,
    matching nn.Sequential(Linear(9, 1), Sigmoid()) followed by x.view(len(x))."""
    n = x.shape[0]
    x = x.astype(jnp.float32)
    w = jnp.asarray(weight, jnp.float32).reshape(1, 9)
    b = jnp.asarray(bias, jnp.float32).reshape(1)

    # Tiny-batch fallback: a Pallas custom call is pure overhead here.
    if n < _MIN_PALLAS_BATCH:
        return jax.nn.sigmoid(x @ w.T + b).reshape(n)

    # If n < tile_m (but >= threshold) use one full-array block; otherwise tile.
    # Partial last tiles rely on Pallas overhang masking: garbage rows only
    # affect overhang output lanes, which are dropped on writeback.
    tm = min(tile_m, n)
    grid = (pl.cdiv(n, tm),)

    out = pl.pallas_call(
        _linear_sigmoid_kernel,
        out_shape=jax.ShapeDtypeStruct((1, n), jnp.float32),
        grid=grid,
        in_specs=[
            pl.BlockSpec((tm, 9), lambda i: (i, 0)),             # batch-tiled x
            pl.BlockSpec((1, 9), lambda i: (0, 0)),              # resident weights
            pl.BlockSpec(memory_space=pltpu.MemorySpace.SMEM),   # bias scalar
        ],
        out_specs=pl.BlockSpec((1, tm), lambda i: (0, i)),       # lane-dense output
        compiler_params=pltpu.CompilerParams(
            dimension_semantics=("parallel",),                   # v7x: 2 TCs
        ),
        cost_estimate=pl.CostEstimate(
            flops=22 * n, transcendentals=n, bytes_accessed=40 * n),
    )(x, w, b)

    return out.reshape(n)  # x.view(len(x))


if __name__ == "__main__":
    key = jax.random.PRNGKey(0)
    k_x, k_w, k_b, k_x2 = jax.random.split(key, 4)

    in_features = 9
    # PyTorch default Linear init range: U(-1/sqrt(9), 1/sqrt(9))
    bound = 1.0 / jnp.sqrt(jnp.float32(in_features))
    weight = jax.random.uniform(k_w, (1, in_features), jnp.float32, -bound, bound)
    bias = jax.random.uniform(k_b, (1,), jnp.float32, -bound, bound)

    # Small batch consistent with the module: exercises the tiny-N fallback.
    x_small = jax.random.normal(k_x, (8, in_features), jnp.float32)
    y_small = insurance_nn_4_forward(x_small, weight, bias)

    # Moderate batch: exercises the tiled Pallas path, incl. a partial last tile
    # (4104 = 2 * 2048 + 8 -> grid of 3 with an overhanging final block).
    n_big = 2 * _TILE_M + 8
    x_big = jax.random.normal(k_x2, (n_big, in_features), jnp.float32)
    y_big = insurance_nn_4_forward(x_big, weight, bias)

    jax.block_until_ready((y_small, y_big))

    # Cross-check against plain-JAX references.
    ref_small = jax.nn.sigmoid(x_small @ weight.T + bias).reshape(-1)
    ref_big = jax.nn.sigmoid(x_big @ weight.T + bias).reshape(-1)

    assert y_small.shape == (8,)
    assert y_big.shape == (n_big,)
    assert jnp.allclose(y_small, ref_small, atol=1e-5), "small-batch mismatch"
    assert jnp.allclose(y_big, ref_big, atol=1e-5), "tiled-kernel mismatch"

    print("KERNEL_OK")
</pallas_src>

<mosaic_0001>
module attributes {stable_mosaic.version = 11 : i64} {
  func.func @_linear_sigmoid_kernel(%arg0: i32, %arg1: memref<2048x9xf32, #tpu.memory_space<vmem>>, %arg2: memref<1x9xf32, #tpu.memory_space<vmem>>, %arg3: memref<1xf32, #tpu.memory_space<smem>>, %arg4: memref<1x2048xf32, #tpu.memory_space<vmem>>) attributes {dimension_semantics = [#tpu.dimension_semantics<parallel>], iteration_bounds = array<i64: 3>, scalar_prefetch = 0 : i64, scratch_operands = 0 : i64, tpu.core_type = #tpu.core_type<tc>, window_params = [{transform_indices = @transform_0, window_bounds = array<i64: 2048, 9>}, {pipeline_mode = #tpu.pipeline_mode<synchronous>, transform_indices = @transform_1, window_bounds = array<i64: 1, 9>}, {transform_indices = @transform_2, window_bounds = array<i64: 1>}, {transform_indices = @transform_3, window_bounds = array<i64: 1, 2048>}]} {
    %c0 = arith.constant 0 : index
    %c0_0 = arith.constant 0 : index
    %0 = vector.load %arg1[%c0, %c0_0] : memref<2048x9xf32, #tpu.memory_space<vmem>>, vector<2048x9xf32>
    %c0_1 = arith.constant 0 : index
    %c0_2 = arith.constant 0 : index
    %1 = vector.load %arg2[%c0_1, %c0_2] : memref<1x9xf32, #tpu.memory_space<vmem>>, vector<1x9xf32>
    %cst = arith.constant dense<0.000000e+00> : vector<1x2048xf32>
    %2 = tpu.matmul %1, %0, %cst {dimension_numbers = #tpu.dot_dimension_numbers<[1], [1], [0], [0], [0, 0, 1, 0], [], []>} : vector<1x9xf32>, vector<2048x9xf32>, vector<1x2048xf32> -> vector<1x2048xf32>
    %c0_3 = arith.constant 0 : index
    %3 = memref.load %arg3[%c0_3] : memref<1xf32, #tpu.memory_space<smem>>
    %4 = vector.broadcast %3 : f32 to vector<1x2048xf32>
    %5 = arith.addf %2, %4 : vector<1x2048xf32>
    %6 = arith.negf %5 : vector<1x2048xf32>
    %7 = math.exp %6 : vector<1x2048xf32>
    %cst_4 = arith.constant 1.000000e+00 : f32
    %8 = vector.broadcast %cst_4 : f32 to vector<1x2048xf32>
    %9 = arith.addf %8, %7 : vector<1x2048xf32>
    %10 = arith.divf %8, %9 : vector<1x2048xf32>
    %c0_5 = arith.constant 0 : index
    %c0_6 = arith.constant 0 : index
    %11 = vector.load %arg4[%c0_5, %c0_6] : memref<1x2048xf32, #tpu.memory_space<vmem>>, vector<1x2048xf32>
    tpu.vector_store %arg4[%c0_5, %c0_6], %10 {strides = array<i32>} : memref<1x2048xf32, #tpu.memory_space<vmem>>, vector<1x2048xf32>,
    return
  }
  func.func @transform_0(%arg0: i32) -> (i32, i32) {
    %c0_i32 = arith.constant 0 : i32
    %c0_i32_0 = arith.constant 0 : i32
    return %arg0, %c0_i32 : i32, i32
  }
  func.func @transform_1(%arg0: i32) -> (i32, i32) {
    %c0_i32 = arith.constant 0 : i32
    %c0_i32_0 = arith.constant 0 : i32
    %c0_i32_1 = arith.constant 0 : i32
    return %c0_i32, %c0_i32_0 : i32, i32
  }
  func.func @transform_2(%arg0: i32) -> i32 {
    %c0_i32 = arith.constant 0 : i32
    %c0_i32_0 = arith.constant 0 : i32
    return %c0_i32 : i32
  }
  func.func @transform_3(%arg0: i32) -> (i32, i32) {
    %c0_i32 = arith.constant 0 : i32
    %c0_i32_0 = arith.constant 0 : i32
    return %c0_i32, %arg0 : i32, i32
  }
}

</mosaic_0001>

<llo_original>
// kernel: tpu_custom_call.1
$region0: #{tpu_custom_call.1}
  #allocation0 [shape = 'u32[]', space=smem, size = 0x4, offset = 0x4, fixed_abs, tag = 'smem constant byte address 0x4 - core index']
  #allocation1 [shape = 'u32[144,128]{1,0:T(1,128)}', space=vmem, size = 0x12000, scoped, tag = 'internal scratch']
  #allocation2 [shape = 'f32[1]{0:T(128)S(6)}', space=smem, size = 0x200, scoped, tag = 'scoped memory for tpu_custom_call.1']
  %s0 = inlined_call_operand.vmem [shape: f32[4104,9], index: 0, kind: input, shape index: {}]
  %s1 = inlined_call_operand.vmem [shape: f32[1,9], index: 1, kind: input, shape index: {}]
  %s2 = inlined_call_operand.<no memory space> [shape: f32[1], index: 2, kind: input, shape index: {}]
  %s3 = inlined_call_operand.hbm [shape: f32[1,4104], index: 3, kind: output, shape index: {}]
  %s4 = sld [smem:[#allocation0]]
  $region45: #{tpu_custom_call.1} parent=0
    _
  %s6 = ssub.s32 1, %s4
  %s7 = scalar_select 0, %s6, %s4
  %8 = sst [smem:[#allocation2]] %s2
  $region1: #{tpu_custom_call.1} parent=0
    #allocation3 [shape = 'u8[16384]{0}', space=vmem, size = 0x4000, scoped, tag = 'output window, operand 0']
    #allocation4 [shape = 's32[2]{0}', space=sflag, size = 0x8, scoped, tag = 'scoped memory for tpu_custom_call.1']
    %9 = vsyncpa [#allocation4], 0
    %s10 = scalar_lea.sflag [#allocation4], 1
    %11 = vsyncpa %s10, 0
    loop: start=0, step=1, limit=5
    $region2: #{tpu_custom_call.1} parent=1 // loop_pre_header
      _
    $region3: #{tpu_custom_call.1} parent=1 // loop_header
      %s13 = sphi 0, %s17
      %p14 = scmp.ge.s32.totalorder %s13, 5
      %s23 = sphi 0, %s25
      %s26 = sphi 0, %s23
      %s27 = sphi 0, %s26
      %s43 = sphi 0, %s27
      %s47 = sphi 0, %s47
      %s49 = sphi 0, %s47
      %s50 = sphi 0, %s49
      %s64 = sphi 0, %s50
      %s68 = sphi 0, %s68
      %s70 = sphi 0, %s68
      %s71 = sphi 0, %s70
      %s85 = sphi 0, %s71
      %s91 = sphi 0, %s93
      %s94 = sphi 0, %s91
      %s95 = sphi 0, %s94
      %s111 = sphi 0, %s95
    $region4: #{tpu_custom_call.1} parent=1 // loop_header_branch
      %16 = sbr.rel (%p14) target = $region8
    $region5: #{tpu_custom_call.1} parent=1 // loop_body
      %s18 = ssub.s32 %s13, 1
      %s19 = ssub.s32 %s13, 2
      %s20 = sadd.s32 %s13, 1
      %s21 = ssub.s32 %s13, %s20
      %p22 = scmp.eq.s32.totalorder %s21, 0
      %s24 = sadd.s32 %s23, 1
      %s25 = scalar_select %p22, %s23, %s24
      %p28 = pneg %p22
      %p29 = scmp.eq.s32.totalorder %s13, 2
      %p30 = por %p28, %p29
      %p31 = scmp.ne.s32.totalorder %s23, %s26
      %p32 = scmp.eq.s32.totalorder %s13, 0
      %p33 = por %p31, %p32
      %p34 = scmp.ne.s32.totalorder %s23, %s26
      %p35 = scmp.eq.s32.totalorder %s18, 2
      %p36 = por %p34, %p35
      %p37 = scmp.ne.s32.totalorder %s26, %s27
      %p38 = scmp.eq.s32.totalorder %s18, 0
      %p39 = por %p37, %p38
      %p40 = scmp.ne.s32.totalorder %s26, %s27
      %p41 = scmp.eq.s32.totalorder %s19, 2
      %p42 = por %p40, %p41
      %p44 = scmp.ne.s32.totalorder %s27, %s43
      %p45 = scmp.eq.s32.totalorder %s19, 0
      %p46 = por %p44, %p45
      %s48 = sadd.s32 %s47, 1
      %p51 = scmp.eq.s32.totalorder %s13, 2
      %p52 = scmp.ne.s32.totalorder %s47, %s49
      %p53 = scmp.eq.s32.totalorder %s13, 0
      %p54 = por %p52, %p53
      %p55 = scmp.ne.s32.totalorder %s47, %s49
      %p56 = scmp.eq.s32.totalorder %s18, 2
      %p57 = por %p55, %p56
      %p58 = scmp.ne.s32.totalorder %s49, %s50
      %p59 = scmp.eq.s32.totalorder %s18, 0
      %p60 = por %p58, %p59
      %p61 = scmp.ne.s32.totalorder %s49, %s50
      %p62 = scmp.eq.s32.totalorder %s19, 2
      %p63 = por %p61, %p62
      %p65 = scmp.ne.s32.totalorder %s50, %s64
      %p66 = scmp.eq.s32.totalorder %s19, 0
      %p67 = por %p65, %p66
      %s69 = sadd.s32 %s68, 1
      %p72 = scmp.eq.s32.totalorder %s13, 2
      %p73 = scmp.ne.s32.totalorder %s68, %s70
      %p74 = scmp.eq.s32.totalorder %s13, 0
      %p75 = por %p73, %p74
      %p76 = scmp.ne.s32.totalorder %s68, %s70
      %p77 = scmp.eq.s32.totalorder %s18, 2
      %p78 = por %p76, %p77
      %p79 = scmp.ne.s32.totalorder %s70, %s71
      %p80 = scmp.eq.s32.totalorder %s18, 0
      %p81 = por %p79, %p80
      %p82 = scmp.ne.s32.totalorder %s70, %s71
      %p83 = scmp.eq.s32.totalorder %s19, 2
      %p84 = por %p82, %p83
      %p86 = scmp.ne.s32.totalorder %s71, %s85
      %p87 = scmp.eq.s32.totalorder %s19, 0
      %p88 = por %p86, %p87
      %s89 = ssub.s32 %s13, %s20
      %p90 = scmp.eq.s32.totalorder %s89, 0
      %s92 = sadd.s32 %s91, 1
      %s93 = scalar_select %p90, %s91, %s92
      %p96 = pneg %p90
      %p97 = scmp.eq.s32.totalorder %s13, 2
      %p98 = por %p96, %p97
      %p99 = scmp.ne.s32.totalorder %s91, %s94
      %p100 = scmp.eq.s32.totalorder %s13, 0
      %p101 = por %p99, %p100
      %p102 = scmp.ne.s32.totalorder %s91, %s94
      %p103 = scmp.eq.s32.totalorder %s18, 2
      %p104 = por %p102, %p103
      %p105 = scmp.ne.s32.totalorder %s94, %s95
      %p106 = scmp.eq.s32.totalorder %s18, 0
      %p107 = por %p105, %p106
      %p108 = scmp.ne.s32.totalorder %s94, %s95
      %p109 = scmp.eq.s32.totalorder %s19, 2
      %p110 = por %p108, %p109
      %p112 = scmp.ne.s32.totalorder %s95, %s111
      %p113 = scmp.eq.s32.totalorder %s19, 0
      %p114 = por %p112, %p113
      %p115 = scmp.le.s32.totalorder 1, %s13
      %p116 = scmp.lt.s32.totalorder %s13, 4
      %p117 = pnand %p115, %p116
      %p118 = pneg %p117
      // Predicated region
      $region9: #{tpu_custom_call.1} parent=5 // pred_check
        _
      $region10: #{tpu_custom_call.1} parent=5 // pred_check_branch
        %120 = sbr.rel (%p117) target = $region12
      $region11: #{tpu_custom_call.1} parent=5 // pred_region
        %s121 = ssub.s32 %s13, 1
        // Predicated region
        $region13: #{tpu_custom_call.1} parent=11 // pred_check
          %p122 = pneg %p60
        $region14: #{tpu_custom_call.1} parent=11 // pred_check_branch
          %124 = sbr.rel (%p122) target = $region16
        $region15: #{tpu_custom_call.1} parent=11 // pred_region
          _
        $region16: #{tpu_custom_call.1} parent=11 // pred_fallthru
          _
        // Predicated region
        $region17: #{tpu_custom_call.1} parent=11 // pred_check
          %p125 = pneg %p81
        $region18: #{tpu_custom_call.1} parent=11 // pred_check_branch
          %127 = sbr.rel (%p125) target = $region20
        $region19: #{tpu_custom_call.1} parent=11 // pred_region
          _
        $region20: #{tpu_custom_call.1} parent=11 // pred_fallthru
          _
      $region12: #{tpu_custom_call.1} parent=5 // pred_fallthru
        _
      %p128 = scmp.lt.s32.totalorder %s13, 3
      // Predicated region
      $region21: #{tpu_custom_call.1} parent=5 // pred_check
        %p129 = pneg %p128
      $region22: #{tpu_custom_call.1} parent=5 // pred_check_branch
        %131 = sbr.rel (%p129) target = $region24
      $region23: #{tpu_custom_call.1} parent=5 // pred_region
        // Predicated region
        $region25: #{tpu_custom_call.1} parent=23 // pred_check
          %p132 = pneg %p33
        $region26: #{tpu_custom_call.1} parent=23 // pred_check_branch
          %134 = sbr.rel (%p132) target = $region28
        $region27: #{tpu_custom_call.1} parent=23 // pred_region
          %s135 = smul.u32 256, %s13
          %s136 = ssub.s32 513, %s135
          %p137 = scmp.lt.s32.totalorder %s136, 256
          %s138 = scalar_select %p137, %s136, 256
          %s139 = smul.u32 128, %s138
          %p140 = scmp.lt.s32.totalorder %s135, 512
          %s141 = scalar_select %p140, %s135, 512
          %s142 = smul.addr %s141, 8
          %s143 = scalar_lea.vmem %s0, %s142
          %s144 = smul.u32 256, %s13
          %s145 = ssub.s32 513, %s144
          %p146 = scmp.lt.s32.totalorder %s145, 256
          %s147 = scalar_select %p146, %s145, 256
          %s148 = smul.u32 128, %s147
        $region28: #{tpu_custom_call.1} parent=23 // pred_fallthru
          _
      $region24: #{tpu_custom_call.1} parent=5 // pred_fallthru
        _
      %p149 = scmp.le.s32.totalorder 1, %s13
      %p150 = scmp.lt.s32.totalorder %s13, 4
      %p151 = pnand %p149, %p150
      %p152 = pneg %p151
      // Predicated region
      $region29: #{tpu_custom_call.1} parent=5 // pred_check
        _
      $region30: #{tpu_custom_call.1} parent=5 // pred_check_branch
        %154 = sbr.rel (%p151) target = $region32
      $region31: #{tpu_custom_call.1} parent=5 // pred_region
        %s155 = ssub.s32 %s13, 1
        %s156 = smul.u32 256, %s18
        %s157 = ssub.s32 513, %s156
        %p158 = scmp.lt.s32.totalorder %s157, 256
        %s159 = scalar_select %p158, %s157, 256
        %s160 = smul.u32 128, %s159
        %p161 = scmp.lt.s32.totalorder %s156, 512
        %s162 = scalar_select %p161, %s156, 512
        %s163 = smul.addr %s162, 8
        %s164 = scalar_lea.vmem %s0, %s163
        %p165 = pneg %p39
        %p166 = pneg %p36
        %p167 = pneg %p60
        %p168 = pneg %p57
        %p169 = pneg %p81
        %p170 = pneg %p78
        %p171 = pneg %p107
        %p172 = pneg %p104
        %s173 = sand.u32 %s94, 1
        %s174 = scalar_lea.sflag [#allocation4], %s173
        %s175 = sand.u32 %s94, 1
        %s176 = smul.addr %s175, 16
        %s177 = scalar_lea.vmem [#allocation3], %s176
        %s178 = smul.u32 256, %s18
        %s179 = ssub.s32 513, %s178
        %p180 = scmp.lt.s32.totalorder %s179, 256
        %s181 = scalar_select %p180, %s179, 256
        %s182 = smul.u32 128, %s181
        %p183 = scmp.lt.s32.totalorder %s178, 512
        %s184 = scalar_select %p183, %s178, 512
        %s185 = smul.addr %s184, 8
        %s186 = scalar_lea.vmem %s0, %s185
        %s187 = smul.u32 256, %s18
        %s188 = ssub.s32 513, %s187
        %p189 = scmp.lt.s32.totalorder %s188, 256
        %s190 = scalar_select %p189, %s188, 256
        %s191 = smul.u32 128, %s190
        %s192 = smul.u32 16, %s18
        %s193 = ssub.s32 33, %s192
        %p194 = scmp.lt.s32.totalorder %s193, 16
        %s195 = scalar_select %p194, %s193, 16
        %s196 = smul.u32 16, %s195
        %v197 = vld [vmem:[%s186] sm:$0xff]
        %v198 = vld [vmem:[%s186 + $0x8] sm:$0xff]
        %v199 = vld [vmem:[%s186 + $0x10] sm:$0xff]
        %v200 = vld [vmem:[%s186 + $0x18] sm:$0xff]
        %v201 = vld [vmem:[%s186 + $0x20] sm:$0xff]
        %v202 = vld [vmem:[%s186 + $0x28] sm:$0xff]
        %v203 = vld [vmem:[%s186 + $0x30] sm:$0xff]
        %v204 = vld [vmem:[%s186 + $0x38] sm:$0xff]
        %v205 = vld [vmem:[%s186 + $0x40] sm:$0xff]
        %v206 = vld [vmem:[%s186 + $0x48] sm:$0xff]
        %v207 = vld [vmem:[%s186 + $0x50] sm:$0xff]
        %v208 = vld [vmem:[%s186 + $0x58] sm:$0xff]
        %v209 = vld [vmem:[%s186 + $0x60] sm:$0xff]
        %v210 = vld [vmem:[%s186 + $0x68] sm:$0xff]
        %v211 = vld [vmem:[%s186 + $0x70] sm:$0xff]
        %v212 = vld [vmem:[%s186 + $0x78] sm:$0xff]
        %v213 = vld [vmem:[%s186 + $0x80] sm:$0xff]
        %v214 = vld [vmem:[%s186 + $0x88] sm:$0xff]
        %v215 = vld [vmem:[%s186 + $0x90] sm:$0xff]
        %v216 = vld [vmem:[%s186 + $0x98] sm:$0xff]
        %v217 = vld [vmem:[%s186 + $0xa0] sm:$0xff]
        %v218 = vld [vmem:[%s186 + $0xa8] sm:$0xff]
        %v219 = vld [vmem:[%s186 + $0xb0] sm:$0xff]
        %v220 = vld [vmem:[%s186 + $0xb8] sm:$0xff]
        %v221 = vld [vmem:[%s186 + $0xc0] sm:$0xff]
        %v222 = vld [vmem:[%s186 + $0xc8] sm:$0xff]
        %v223 = vld [vmem:[%s186 + $0xd0] sm:$0xff]
        %v224 = vld [vmem:[%s186 + $0xd8] sm:$0xff]
        %v225 = vld [vmem:[%s186 + $0xe0] sm:$0xff]
        %v226 = vld [vmem:[%s186 + $0xe8] sm:$0xff]
        %v227 = vld [vmem:[%s186 + $0xf0] sm:$0xff]
        %v228 = vld [vmem:[%s186 + $0xf8] sm:$0xff]
        %v229 = vld [vmem:[%s186 + $0x100] sm:$0xff]
        %v230 = vld [vmem:[%s186 + $0x108] sm:$0xff]
        %v231 = vld [vmem:[%s186 + $0x110] sm:$0xff]
        %v232 = vld [vmem:[%s186 + $0x118] sm:$0xff]
        %v233 = vld [vmem:[%s186 + $0x120] sm:$0xff]
        %v234 = vld [vmem:[%s186 + $0x128] sm:$0xff]
        %v235 = vld [vmem:[%s186 + $0x130] sm:$0xff]
        %v236 = vld [vmem:[%s186 + $0x138] sm:$0xff]
        %v237 = vld [vmem:[%s186 + $0x140] sm:$0xff]
        %v238 = vld [vmem:[%s186 + $0x148] sm:$0xff]
        %v239 = vld [vmem:[%s186 + $0x150] sm:$0xff]
        %v240 = vld [vmem:[%s186 + $0x158] sm:$0xff]
        %v241 = vld [vmem:[%s186 + $0x160] sm:$0xff]
        %v242 = vld [vmem:[%s186 + $0x168] sm:$0xff]
        %v243 = vld [vmem:[%s186 + $0x170] sm:$0xff]
        %v244 = vld [vmem:[%s186 + $0x178] sm:$0xff]
        %v245 = vld [vmem:[%s186 + $0x180] sm:$0xff]
        %v246 = vld [vmem:[%s186 + $0x188] sm:$0xff]
        %v247 = vld [vmem:[%s186 + $0x190] sm:$0xff]
        %v248 = vld [vmem:[%s186 + $0x198] sm:$0xff]
        %v249 = vld [vmem:[%s186 + $0x1a0] sm:$0xff]
        %v250 = vld [vmem:[%s186 + $0x1a8] sm:$0xff]
        %v251 = vld [vmem:[%s186 + $0x1b0] sm:$0xff]
        %v252 = vld [vmem:[%s186 + $0x1b8] sm:$0xff]
        %v253 = vld [vmem:[%s186 + $0x1c0] sm:$0xff]
        %v254 = vld [vmem:[%s186 + $0x1c8] sm:$0xff]
        %v255 = vld [vmem:[%s186 + $0x1d0] sm:$0xff]
        %v256 = vld [vmem:[%s186 + $0x1d8] sm:$0xff]
        %v257 = vld [vmem:[%s186 + $0x1e0] sm:$0xff]
        %v258 = vld [vmem:[%s186 + $0x1e8] sm:$0xff]
        %v259 = vld [vmem:[%s186 + $0x1f0] sm:$0xff]
        %v260 = vld [vmem:[%s186 + $0x1f8] sm:$0xff]
        %v261 = vld [vmem:[%s186 + $0x200] sm:$0xff]
        %v262 = vld [vmem:[%s186 + $0x208] sm:$0xff]
        %v263 = vld [vmem:[%s186 + $0x210] sm:$0xff]
        %v264 = vld [vmem:[%s186 + $0x218] sm:$0xff]
        %v265 = vld [vmem:[%s186 + $0x220] sm:$0xff]
        %v266 = vld [vmem:[%s186 + $0x228] sm:$0xff]
        %v267 = vld [vmem:[%s186 + $0x230] sm:$0xff]
        %v268 = vld [vmem:[%s186 + $0x238] sm:$0xff]
        %v269 = vld [vmem:[%s186 + $0x240] sm:$0xff]
        %v270 = vld [vmem:[%s186 + $0x248] sm:$0xff]
        %v271 = vld [vmem:[%s186 + $0x250] sm:$0xff]
        %v272 = vld [vmem:[%s186 + $0x258] sm:$0xff]
        %v273 = vld [vmem:[%s186 + $0x260] sm:$0xff]
        %v274 = vld [vmem:[%s186 + $0x268] sm:$0xff]
        %v275 = vld [vmem:[%s186 + $0x270] sm:$0xff]
        %v276 = vld [vmem:[%s186 + $0x278] sm:$0xff]
        %v277 = vld [vmem:[%s186 + $0x280] sm:$0xff]
        %v278 = vld [vmem:[%s186 + $0x288] sm:$0xff]
        %v279 = vld [vmem:[%s186 + $0x290] sm:$0xff]
        %v280 = vld [vmem:[%s186 + $0x298] sm:$0xff]
        %v281 = vld [vmem:[%s186 + $0x2a0] sm:$0xff]
        %v282 = vld [vmem:[%s186 + $0x2a8] sm:$0xff]
        %v283 = vld [vmem:[%s186 + $0x2b0] sm:$0xff]
        %v284 = vld [vmem:[%s186 + $0x2b8] sm:$0xff]
        %v285 = vld [vmem:[%s186 + $0x2c0] sm:$0xff]
        %v286 = vld [vmem:[%s186 + $0x2c8] sm:$0xff]
        %v287 = vld [vmem:[%s186 + $0x2d0] sm:$0xff]
        %v288 = vld [vmem:[%s186 + $0x2d8] sm:$0xff]
        %v289 = vld [vmem:[%s186 + $0x2e0] sm:$0xff]
        %v290 = vld [vmem:[%s186 + $0x2e8] sm:$0xff]
        %v291 = vld [vmem:[%s186 + $0x2f0] sm:$0xff]
        %v292 = vld [vmem:[%s186 + $0x2f8] sm:$0xff]
        %v293 = vld [vmem:[%s186 + $0x300] sm:$0xff]
        %v294 = vld [vmem:[%s186 + $0x308] sm:$0xff]
        %v295 = vld [vmem:[%s186 + $0x310] sm:$0xff]
        %v296 = vld [vmem:[%s186 + $0x318] sm:$0xff]
        %v297 = vld [vmem:[%s186 + $0x320] sm:$0xff]
        %v298 = vld [vmem:[%s186 + $0x328] sm:$0xff]
        %v299 = vld [vmem:[%s186 + $0x330] sm:$0xff]
        %v300 = vld [vmem:[%s186 + $0x338] sm:$0xff]
        %v301 = vld [vmem:[%s186 + $0x340] sm:$0xff]
        %v302 = vld [vmem:[%s186 + $0x348] sm:$0xff]
        %v303 = vld [vmem:[%s186 + $0x350] sm:$0xff]
        %v304 = vld [vmem:[%s186 + $0x358] sm:$0xff]
        %v305 = vld [vmem:[%s186 + $0x360] sm:$0xff]
        %v306 = vld [vmem:[%s186 + $0x368] sm:$0xff]
        %v307 = vld [vmem:[%s186 + $0x370] sm:$0xff]
        %v308 = vld [vmem:[%s186 + $0x378] sm:$0xff]
        %v309 = vld [vmem:[%s186 + $0x380] sm:$0xff]
        %v310 = vld [vmem:[%s186 + $0x388] sm:$0xff]
        %v311 = vld [vmem:[%s186 + $0x390] sm:$0xff]
        %v312 = vld [vmem:[%s186 + $0x398] sm:$0xff]
        %v313 = vld [vmem:[%s186 + $0x3a0] sm:$0xff]
        %v314 = vld [vmem:[%s186 + $0x3a8] sm:$0xff]
        %v315 = vld [vmem:[%s186 + $0x3b0] sm:$0xff]
        %v316 = vld [vmem:[%s186 + $0x3b8] sm:$0xff]
        %v317 = vld [vmem:[%s186 + $0x3c0] sm:$0xff]
        %v318 = vld [vmem:[%s186 + $0x3c8] sm:$0xff]
        %v319 = vld [vmem:[%s186 + $0x3d0] sm:$0xff]
        %v320 = vld [vmem:[%s186 + $0x3d8] sm:$0xff]
        %v321 = vld [vmem:[%s186 + $0x3e0] sm:$0xff]
        %v322 = vld [vmem:[%s186 + $0x3e8] sm:$0xff]
        %v323 = vld [vmem:[%s186 + $0x3f0] sm:$0xff]
        %v324 = vld [vmem:[%s186 + $0x3f8] sm:$0xff]
        %v325 = vld [vmem:[%s186 + $0x400] sm:$0xff]
        %v326 = vld [vmem:[%s186 + $0x408] sm:$0xff]
        %v327 = vld [vmem:[%s186 + $0x410] sm:$0xff]
        %v328 = vld [vmem:[%s186 + $0x418] sm:$0xff]
        %v329 = vld [vmem:[%s186 + $0x420] sm:$0xff]
        %v330 = vld [vmem:[%s186 + $0x428] sm:$0xff]
        %v331 = vld [vmem:[%s186 + $0x430] sm:$0xff]
        %v332 = vld [vmem:[%s186 + $0x438] sm:$0xff]
        %v333 = vld [vmem:[%s186 + $0x440] sm:$0xff]
        %v334 = vld [vmem:[%s186 + $0x448] sm:$0xff]
        %v335 = vld [vmem:[%s186 + $0x450] sm:$0xff]
        %v336 = vld [vmem:[%s186 + $0x458] sm:$0xff]
        %v337 = vld [vmem:[%s186 + $0x460] sm:$0xff]
        %v338 = vld [vmem:[%s186 + $0x468] sm:$0xff]
        %v339 = vld [vmem:[%s186 + $0x470] sm:$0xff]
        %v340 = vld [vmem:[%s186 + $0x478] sm:$0xff]
        %v341 = vld [vmem:[%s186 + $0x480] sm:$0xff]
        %v342 = vld [vmem:[%s186 + $0x488] sm:$0xff]
        %v343 = vld [vmem:[%s186 + $0x490] sm:$0xff]
        %v344 = vld [vmem:[%s186 + $0x498] sm:$0xff]
        %v345 = vld [vmem:[%s186 + $0x4a0] sm:$0xff]
        %v346 = vld [vmem:[%s186 + $0x4a8] sm:$0xff]
        %v347 = vld [vmem:[%s186 + $0x4b0] sm:$0xff]
        %v348 = vld [vmem:[%s186 + $0x4b8] sm:$0xff]
        %v349 = vld [vmem:[%s186 + $0x4c0] sm:$0xff]
        %v350 = vld [vmem:[%s186 + $0x4c8] sm:$0xff]
        %v351 = vld [vmem:[%s186 + $0x4d0] sm:$0xff]
        %v352 = vld [vmem:[%s186 + $0x4d8] sm:$0xff]
        %v353 = vld [vmem:[%s186 + $0x4e0] sm:$0xff]
        %v354 = vld [vmem:[%s186 + $0x4e8] sm:$0xff]
        %v355 = vld [vmem:[%s186 + $0x4f0] sm:$0xff]
        %v356 = vld [vmem:[%s186 + $0x4f8] sm:$0xff]
        %v357 = vld [vmem:[%s186 + $0x500] sm:$0xff]
        %v358 = vld [vmem:[%s186 + $0x508] sm:$0xff]
        %v359 = vld [vmem:[%s186 + $0x510] sm:$0xff]
        %v360 = vld [vmem:[%s186 + $0x518] sm:$0xff]
        %v361 = vld [vmem:[%s186 + $0x520] sm:$0xff]
        %v362 = vld [vmem:[%s186 + $0x528] sm:$0xff]
        %v363 = vld [vmem:[%s186 + $0x530] sm:$0xff]
        %v364 = vld [vmem:[%s186 + $0x538] sm:$0xff]
        %v365 = vld [vmem:[%s186 + $0x540] sm:$0xff]
        %v366 = vld [vmem:[%s186 + $0x548] sm:$0xff]
        %v367 = vld [vmem:[%s186 + $0x550] sm:$0xff]
        %v368 = vld [vmem:[%s186 + $0x558] sm:$0xff]
        %v369 = vld [vmem:[%s186 + $0x560] sm:$0xff]
        %v370 = vld [vmem:[%s186 + $0x568] sm:$0xff]
        %v371 = vld [vmem:[%s186 + $0x570] sm:$0xff]
        %v372 = vld [vmem:[%s186 + $0x578] sm:$0xff]
        %v373 = vld [vmem:[%s186 + $0x580] sm:$0xff]
        %v374 = vld [vmem:[%s186 + $0x588] sm:$0xff]
        %v375 = vld [vmem:[%s186 + $0x590] sm:$0xff]
        %v376 = vld [vmem:[%s186 + $0x598] sm:$0xff]
        %v377 = vld [vmem:[%s186 + $0x5a0] sm:$0xff]
        %v378 = vld [vmem:[%s186 + $0x5a8] sm:$0xff]
        %v379 = vld [vmem:[%s186 + $0x5b0] sm:$0xff]
        %v380 = vld [vmem:[%s186 + $0x5b8] sm:$0xff]
        %v381 = vld [vmem:[%s186 + $0x5c0] sm:$0xff]
        %v382 = vld [vmem:[%s186 + $0x5c8] sm:$0xff]
        %v383 = vld [vmem:[%s186 + $0x5d0] sm:$0xff]
        %v384 = vld [vmem:[%s186 + $0x5d8] sm:$0xff]
        %v385 = vld [vmem:[%s186 + $0x5e0] sm:$0xff]
        %v386 = vld [vmem:[%s186 + $0x5e8] sm:$0xff]
        %v387 = vld [vmem:[%s186 + $0x5f0] sm:$0xff]
        %v388 = vld [vmem:[%s186 + $0x5f8] sm:$0xff]
        %v389 = vld [vmem:[%s186 + $0x600] sm:$0xff]
        %v390 = vld [vmem:[%s186 + $0x608] sm:$0xff]
        %v391 = vld [vmem:[%s186 + $0x610] sm:$0xff]
        %v392 = vld [vmem:[%s186 + $0x618] sm:$0xff]
        %v393 = vld [vmem:[%s186 + $0x620] sm:$0xff]
        %v394 = vld [vmem:[%s186 + $0x628] sm:$0xff]
        %v395 = vld [vmem:[%s186 + $0x630] sm:$0xff]
        %v396 = vld [vmem:[%s186 + $0x638] sm:$0xff]
        %v397 = vld [vmem:[%s186 + $0x640] sm:$0xff]
        %v398 = vld [vmem:[%s186 + $0x648] sm:$0xff]
        %v399 = vld [vmem:[%s186 + $0x650] sm:$0xff]
        %v400 = vld [vmem:[%s186 + $0x658] sm:$0xff]
        %v401 = vld [vmem:[%s186 + $0x660] sm:$0xff]
        %v402 = vld [vmem:[%s186 + $0x668] sm:$0xff]
        %v403 = vld [vmem:[%s186 + $0x670] sm:$0xff]
        %v404 = vld [vmem:[%s186 + $0x678] sm:$0xff]
        %v405 = vld [vmem:[%s186 + $0x680] sm:$0xff]
        %v406 = vld [vmem:[%s186 + $0x688] sm:$0xff]
        %v407 = vld [vmem:[%s186 + $0x690] sm:$0xff]
        %v408 = vld [vmem:[%s186 + $0x698] sm:$0xff]
        %v409 = vld [vmem:[%s186 + $0x6a0] sm:$0xff]
        %v410 = vld [vmem:[%s186 + $0x6a8] sm:$0xff]
        %v411 = vld [vmem:[%s186 + $0x6b0] sm:$0xff]
        %v412 = vld [vmem:[%s186 + $0x6b8] sm:$0xff]
        %v413 = vld [vmem:[%s186 + $0x6c0] sm:$0xff]
        %v414 = vld [vmem:[%s186 + $0x6c8] sm:$0xff]
        %v415 = vld [vmem:[%s186 + $0x6d0] sm:$0xff]
        %v416 = vld [vmem:[%s186 + $0x6d8] sm:$0xff]
        %v417 = vld [vmem:[%s186 + $0x6e0] sm:$0xff]
        %v418 = vld [vmem:[%s186 + $0x6e8] sm:$0xff]
        %v419 = vld [vmem:[%s186 + $0x6f0] sm:$0xff]
        %v420 = vld [vmem:[%s186 + $0x6f8] sm:$0xff]
        %v421 = vld [vmem:[%s186 + $0x700] sm:$0xff]
        %v422 = vld [vmem:[%s186 + $0x708] sm:$0xff]
        %v423 = vld [vmem:[%s186 + $0x710] sm:$0xff]
        %v424 = vld [vmem:[%s186 + $0x718] sm:$0xff]
        %v425 = vld [vmem:[%s186 + $0x720] sm:$0xff]
        %v426 = vld [vmem:[%s186 + $0x728] sm:$0xff]
        %v427 = vld [vmem:[%s186 + $0x730] sm:$0xff]
        %v428 = vld [vmem:[%s186 + $0x738] sm:$0xff]
        %v429 = vld [vmem:[%s186 + $0x740] sm:$0xff]
        %v430 = vld [vmem:[%s186 + $0x748] sm:$0xff]
        %v431 = vld [vmem:[%s186 + $0x750] sm:$0xff]
        %v432 = vld [vmem:[%s186 + $0x758] sm:$0xff]
        %v433 = vld [vmem:[%s186 + $0x760] sm:$0xff]
        %v434 = vld [vmem:[%s186 + $0x768] sm:$0xff]
        %v435 = vld [vmem:[%s186 + $0x770] sm:$0xff]
        %v436 = vld [vmem:[%s186 + $0x778] sm:$0xff]
        %v437 = vld [vmem:[%s186 + $0x780] sm:$0xff]
        %v438 = vld [vmem:[%s186 + $0x788] sm:$0xff]
        %v439 = vld [vmem:[%s186 + $0x790] sm:$0xff]
        %v440 = vld [vmem:[%s186 + $0x798] sm:$0xff]
        %v441 = vld [vmem:[%s186 + $0x7a0] sm:$0xff]
        %v442 = vld [vmem:[%s186 + $0x7a8] sm:$0xff]
        %v443 = vld [vmem:[%s186 + $0x7b0] sm:$0xff]
        %v444 = vld [vmem:[%s186 + $0x7b8] sm:$0xff]
        %v445 = vld [vmem:[%s186 + $0x7c0] sm:$0xff]
        %v446 = vld [vmem:[%s186 + $0x7c8] sm:$0xff]
        %v447 = vld [vmem:[%s186 + $0x7d0] sm:$0xff]
        %v448 = vld [vmem:[%s186 + $0x7d8] sm:$0xff]
        %v449 = vld [vmem:[%s186 + $0x7e0] sm:$0xff]
        %v450 = vld [vmem:[%s186 + $0x7e8] sm:$0xff]
        %v451 = vld [vmem:[%s186 + $0x7f0] sm:$0xff]
        %v452 = vld [vmem:[%s186 + $0x7f8] sm:$0xff]
        %v453 = vld [vmem:[%s1] sm:$0x1]
        %s454 = sld [smem:[#allocation2]]
        %v455 = vstv %s454
        %vm456 = vcmask 72704
        %v458 = vsel %vm456, %v453, 0
        %v461 = vsel %vm456, %v197, 0
        %v464 = vsel %vm456, %v198, 0
        %v467 = vsel %vm456, %v199, 0
        %v470 = vsel %vm456, %v200, 0
        %v473 = vsel %vm456, %v201, 0
        %v476 = vsel %vm456, %v202, 0
        %v479 = vsel %vm456, %v203, 0
        %v482 = vsel %vm456, %v204, 0
        %v485 = vsel %vm456, %v205, 0
        %v488 = vsel %vm456, %v206, 0
        %v491 = vsel %vm456, %v207, 0
        %v494 = vsel %vm456, %v208, 0
        %v497 = vsel %vm456, %v209, 0
        %v500 = vsel %vm456, %v210, 0
        %v503 = vsel %vm456, %v211, 0
        %v506 = vsel %vm456, %v212, 0
        %v509 = vsel %vm456, %v213, 0
        %v512 = vsel %vm456, %v214, 0
        %v515 = vsel %vm456, %v215, 0
        %v518 = vsel %vm456, %v216, 0
        %v521 = vsel %vm456, %v217, 0
        %v524 = vsel %vm456, %v218, 0
        %v527 = vsel %vm456, %v219, 0
        %v530 = vsel %vm456, %v220, 0
        %v533 = vsel %vm456, %v221, 0
        %v536 = vsel %vm456, %v222, 0
        %v539 = vsel %vm456, %v223, 0
        %v542 = vsel %vm456, %v224, 0
        %v545 = vsel %vm456, %v225, 0
        %v548 = vsel %vm456, %v226, 0
        %v551 = vsel %vm456, %v227, 0
        %v554 = vsel %vm456, %v228, 0
        %v557 = vsel %vm456, %v229, 0
        %v560 = vsel %vm456, %v230, 0
        %v563 = vsel %vm456, %v231, 0
        %v566 = vsel %vm456, %v232, 0
        %v569 = vsel %vm456, %v233, 0
        %v572 = vsel %vm456, %v234, 0
        %v575 = vsel %vm456, %v235, 0
        %v578 = vsel %vm456, %v236, 0
        %v581 = vsel %vm456, %v237, 0
        %v584 = vsel %vm456, %v238, 0
        %v587 = vsel %vm456, %v239, 0
        %v590 = vsel %vm456, %v240, 0
        %v593 = vsel %vm456, %v241, 0
        %v596 = vsel %vm456, %v242, 0
        %v599 = vsel %vm456, %v243, 0
        %v602 = vsel %vm456, %v244, 0
        %v605 = vsel %vm456, %v245, 0
        %v608 = vsel %vm456, %v246, 0
        %v611 = vsel %vm456, %v247, 0
        %v614 = vsel %vm456, %v248, 0
        %v617 = vsel %vm456, %v249, 0
        %v620 = vsel %vm456, %v250, 0
        %v623 = vsel %vm456, %v251, 0
        %v626 = vsel %vm456, %v252, 0
        %v629 = vsel %vm456, %v253, 0
        %v632 = vsel %vm456, %v254, 0
        %v635 = vsel %vm456, %v255, 0
        %v638 = vsel %vm456, %v256, 0
        %v641 = vsel %vm456, %v257, 0
        %v644 = vsel %vm456, %v258, 0
        %v647 = vsel %vm456, %v259, 0
        %v650 = vsel %vm456, %v260, 0
        %v653 = vsel %vm456, %v261, 0
        %v656 = vsel %vm456, %v262, 0
        %v659 = vsel %vm456, %v263, 0
        %v662 = vsel %vm456, %v264, 0
        %v665 = vsel %vm456, %v265, 0
        %v668 = vsel %vm456, %v266, 0
        %v671 = vsel %vm456, %v267, 0
        %v674 = vsel %vm456, %v268, 0
        %v677 = vsel %vm456, %v269, 0
        %v680 = vsel %vm456, %v270, 0
        %v683 = vsel %vm456, %v271, 0
        %v686 = vsel %vm456, %v272, 0
        %v689 = vsel %vm456, %v273, 0
        %v692 = vsel %vm456, %v274, 0
        %v695 = vsel %vm456, %v275, 0
        %v698 = vsel %vm456, %v276, 0
        %v701 = vsel %vm456, %v277, 0
        %v704 = vsel %vm456, %v278, 0
        %v707 = vsel %vm456, %v279, 0
        %v710 = vsel %vm456, %v280, 0
        %v713 = vsel %vm456, %v281, 0
        %v716 = vsel %vm456, %v282, 0
        %v719 = vsel %vm456, %v283, 0
        %v722 = vsel %vm456, %v284, 0
        %v725 = vsel %vm456, %v285, 0
        %v728 = vsel %vm456, %v286, 0
        %v731 = vsel %vm456, %v287, 0
        %v734 = vsel %vm456, %v288, 0
        %v737 = vsel %vm456, %v289, 0
        %v740 = vsel %vm456, %v290, 0
        %v743 = vsel %vm456, %v291, 0
        %v746 = vsel %vm456, %v292, 0
        %v749 = vsel %vm456, %v293, 0
        %v752 = vsel %vm456, %v294, 0
        %v755 = vsel %vm456, %v295, 0
        %v758 = vsel %vm456, %v296, 0
        %v761 = vsel %vm456, %v297, 0
        %v764 = vsel %vm456, %v298, 0
        %v767 = vsel %vm456, %v299, 0
        %v770 = vsel %vm456, %v300, 0
        %v773 = vsel %vm456, %v301, 0
        %v776 = vsel %vm456, %v302, 0
        %v779 = vsel %vm456, %v303, 0
        %v782 = vsel %vm456, %v304, 0
        %v785 = vsel %vm456, %v305, 0
        %v788 = vsel %vm456, %v306, 0
        %v791 = vsel %vm456, %v307, 0
        %v794 = vsel %vm456, %v308, 0
        %v797 = vsel %vm456, %v309, 0
        %v800 = vsel %vm456, %v310, 0
        %v803 = vsel %vm456, %v311, 0
        %v806 = vsel %vm456, %v312, 0
        %v809 = vsel %vm456, %v313, 0
        %v812 = vsel %vm456, %v314, 0
        %v815 = vsel %vm456, %v315, 0
        %v818 = vsel %vm456, %v316, 0
        %v821 = vsel %vm456, %v317, 0
        %v824 = vsel %vm456, %v318, 0
        %v827 = vsel %vm456, %v319, 0
        %v830 = vsel %vm456, %v320, 0
        %v833 = vsel %vm456, %v321, 0
        %v836 = vsel %vm456, %v322, 0
        %v839 = vsel %vm456, %v323, 0
        %v842 = vsel %vm456, %v324, 0
        %v845 = vsel %vm456, %v325, 0
        %v848 = vsel %vm456, %v326, 0
        %v851 = vsel %vm456, %v327, 0
        %v854 = vsel %vm456, %v328, 0
        %v857 = vsel %vm456, %v329, 0
        %v860 = vsel %vm456, %v330, 0
        %v863 = vsel %vm456, %v331, 0
        %v866 = vsel %vm456, %v332, 0
        %v869 = vsel %vm456, %v333, 0
        %v872 = vsel %vm456, %v334, 0
        %v875 = vsel %vm456, %v335, 0
        %v878 = vsel %vm456, %v336, 0
        %v881 = vsel %vm456, %v337, 0
        %v884 = vsel %vm456, %v338, 0
        %v887 = vsel %vm456, %v339, 0
        %v890 = vsel %vm456, %v340, 0
        %v893 = vsel %vm456, %v341, 0
        %v896 = vsel %vm456, %v342, 0
        %v899 = vsel %vm456, %v343, 0
        %v902 = vsel %vm456, %v344, 0
        %v905 = vsel %vm456, %v345, 0
        %v908 = vsel %vm456, %v346, 0
        %v911 = vsel %vm456, %v347, 0
        %v914 = vsel %vm456, %v348, 0
        %v917 = vsel %vm456, %v349, 0
        %v920 = vsel %vm456, %v350, 0
        %v923 = vsel %vm456, %v351, 0
        %v926 = vsel %vm456, %v352, 0
        %v929 = vsel %vm456, %v353, 0
        %v932 = vsel %vm456, %v354, 0
        %v935 = vsel %vm456, %v355, 0
        %v938 = vsel %vm456, %v356, 0
        %v941 = vsel %vm456, %v357, 0
        %v944 = vsel %vm456, %v358, 0
        %v947 = vsel %vm456, %v359, 0
        %v950 = vsel %vm456, %v360, 0
        %v953 = vsel %vm456, %v361, 0
        %v956 = vsel %vm456, %v362, 0
        %v959 = vsel %vm456, %v363, 0
        %v962 = vsel %vm456, %v364, 0
        %v965 = vsel %vm456, %v365, 0
        %v968 = vsel %vm456, %v366, 0
        %v971 = vsel %vm456, %v367, 0
        %v974 = vsel %vm456, %v368, 0
        %v977 = vsel %vm456, %v369, 0
        %v980 = vsel %vm456, %v370, 0
        %v983 = vsel %vm456, %v371, 0
        %v986 = vsel %vm456, %v372, 0
        %v989 = vsel %vm456, %v373, 0
        %v992 = vsel %vm456, %v374, 0
        %v995 = vsel %vm456, %v375, 0
        %v998 = vsel %vm456, %v376, 0
        %v1001 = vsel %vm456, %v377, 0
        %v1004 = vsel %vm456, %v378, 0
        %v1007 = vsel %vm456, %v379, 0
        %v1010 = vsel %vm456, %v380, 0
        %v1013 = vsel %vm456, %v381, 0
        %v1016 = vsel %vm456, %v382, 0
        %v1019 = vsel %vm456, %v383, 0
        %v1022 = vsel %vm456, %v384, 0
        %v1025 = vsel %vm456, %v385, 0
        %v1028 = vsel %vm456, %v386, 0
        %v1031 = vsel %vm456, %v387, 0
        %v1034 = vsel %vm456, %v388, 0
        %v1037 = vsel %vm456, %v389, 0
        %v1040 = vsel %vm456, %v390, 0
        %v1043 = vsel %vm456, %v391, 0
        %v1046 = vsel %vm456, %v392, 0
        %v1049 = vsel %vm456, %v393, 0
        %v1052 = vsel %vm456, %v394, 0
        %v1055 = vsel %vm456, %v395, 0
        %v1058 = vsel %vm456, %v396, 0
        %v1061 = vsel %vm456, %v397, 0
        %v1064 = vsel %vm456, %v398, 0
        %v1067 = vsel %vm456, %v399, 0
        %v1070 = vsel %vm456, %v400, 0
        %v1073 = vsel %vm456, %v401, 0
        %v1076 = vsel %vm456, %v402, 0
        %v1079 = vsel %vm456, %v403, 0
        %v1082 = vsel %vm456, %v404, 0
        %v1085 = vsel %vm456, %v405, 0
        %v1088 = vsel %vm456, %v406, 0
        %v1091 = vsel %vm456, %v407, 0
        %v1094 = vsel %vm456, %v408, 0
        %v1097 = vsel %vm456, %v409, 0
        %v1100 = vsel %vm456, %v410, 0
        %v1103 = vsel %vm456, %v411, 0
        %v1106 = vsel %vm456, %v412, 0
        %v1109 = vsel %vm456, %v413, 0
        %v1112 = vsel %vm456, %v414, 0
        %v1115 = vsel %vm456, %v415, 0
        %v1118 = vsel %vm456, %v416, 0
        %v1121 = vsel %vm456, %v417, 0
        %v1124 = vsel %vm456, %v418, 0
        %v1127 = vsel %vm456, %v419, 0
        %v1130 = vsel %vm456, %v420, 0
        %v1133 = vsel %vm456, %v421, 0
        %v1136 = vsel %vm456, %v422, 0
        %v1139 = vsel %vm456, %v423, 0
        %v1142 = vsel %vm456, %v424, 0
        %v1145 = vsel %vm456, %v425, 0
        %v1148 = vsel %vm456, %v426, 0
        %v1151 = vsel %vm456, %v427, 0
        %v1154 = vsel %vm456, %v428, 0
        %v1157 = vsel %vm456, %v429, 0
        %v1160 = vsel %vm456, %v430, 0
        %v1163 = vsel %vm456, %v431, 0
        %v1166 = vsel %vm456, %v432, 0
        %v1169 = vsel %vm456, %v433, 0
        %v1172 = vsel %vm456, %v434, 0
        %v1175 = vsel %vm456, %v435, 0
        %v1178 = vsel %vm456, %v436, 0
        %v1181 = vsel %vm456, %v437, 0
        %v1184 = vsel %vm456, %v438, 0
        %v1187 = vsel %vm456, %v439, 0
        %v1190 = vsel %vm456, %v440, 0
        %v1193 = vsel %vm456, %v441, 0
        %v1196 = vsel %vm456, %v442, 0
        %v1199 = vsel %vm456, %v443, 0
        %v1202 = vsel %vm456, %v444, 0
        %v1205 = vsel %vm456, %v445, 0
        %v1208 = vsel %vm456, %v446, 0
        %v1211 = vsel %vm456, %v447, 0
        %v1214 = vsel %vm456, %v448, 0
        %v1217 = vsel %vm456, %v449, 0
        %v1220 = vsel %vm456, %v450, 0
        %v1223 = vsel %vm456, %v451, 0
        %v1226 = vsel %vm456, %v452, 0
        %1228 = vmatprep.subr.mxu0 0.0
        %1229 = vmatpush1.xpose.msra.mxu0 %v506
        %1230 = vmatprep.subr.mxu0 0.0
        %1231 = vmatpush1.xpose.msra.mxu0 %v503
        %1232 = vmatprep.subr.mxu0 0.0
        %1233 = vmatpush1.xpose.msra.mxu0 %v500
        %1234 = vmatprep.subr.mxu0 0.0
        %1235 = vmatpush1.xpose.msra.mxu0 %v497
        %1236 = vmatprep.subr.mxu0 0.0
        %1237 = vmatpush1.xpose.msra.mxu0 %v494
        %1238 = vmatprep.subr.mxu0 0.0
        %1239 = vmatpush1.xpose.msra.mxu0 %v491
        %1240 = vmatprep.subr.mxu0 0.0
        %1241 = vmatpush1.xpose.msra.mxu0 %v488
        %1242 = vmatprep.subr.mxu0 0.0
        %1243 = vmatpush1.xpose.msra.mxu0 %v485
        %1244 = vmatprep.subr.mxu0 0.0
        %1245 = vmatpush1.xpose.msra.mxu0 %v482
        %1246 = vmatprep.subr.mxu0 0.0
        %1247 = vmatpush1.xpose.msra.mxu0 %v479
        %1248 = vmatprep.subr.mxu0 0.0
        %1249 = vmatpush1.xpose.msra.mxu0 %v476
        %1250 = vmatprep.subr.mxu0 0.0
        %1251 = vmatpush1.xpose.msra.mxu0 %v473
        %1252 = vmatprep.subr.mxu0 0.0
        %1253 = vmatpush1.xpose.msra.mxu0 %v470
        %1254 = vmatprep.subr.mxu0 0.0
        %1255 = vmatpush1.xpose.msra.mxu0 %v467
        %1256 = vmatprep.subr.mxu0 0.0
        %1257 = vmatpush1.xpose.msra.mxu0 %v464
        %1258 = vmatprep.subr.mxu0 0.0
        %1259 = vmatpush1.xpose.msra.mxu0 %v461
        %1260 = vmatprep.subr.mxu0 0.0
        %1261 = vmatpush2.xpose.msra.mxu0 %v554
        %1262 = vmatprep.subr.mxu0 0.0
        %1263 = vmatpush2.xpose.msra.mxu0 %v551
        %1264 = vmatprep.subr.mxu0 0.0
        %1265 = vmatpush2.xpose.msra.mxu0 %v548
        %1266 = vmatprep.subr.mxu0 0.0
        %1267 = vmatpush2.xpose.msra.mxu0 %v545
        %1268 = vmatprep.subr.mxu0 0.0
        %1269 = vmatpush2.xpose.msra.mxu0 %v542
        %1270 = vmatprep.subr.mxu0 0.0
        %1271 = vmatpush2.xpose.msra.mxu0 %v539
        %1272 = vmatprep.subr.mxu0 0.0
        %1273 = vmatpush2.xpose.msra.mxu0 %v536
        %1274 = vmatprep.subr.mxu0 0.0
        %1275 = vmatpush2.xpose.msra.mxu0 %v533
        %1276 = vmatprep.subr.mxu0 0.0
        %1277 = vmatpush2.xpose.msra.mxu0 %v530
        %1278 = vmatprep.subr.mxu0 0.0
        %1279 = vmatpush2.xpose.msra.mxu0 %v527
        %1280 = vmatprep.subr.mxu0 0.0
        %1281 = vmatpush2.xpose.msra.mxu0 %v524
        %1282 = vmatprep.subr.mxu0 0.0
        %1283 = vmatpush2.xpose.msra.mxu0 %v521
        %1284 = vmatprep.subr.mxu0 0.0
        %1285 = vmatpush2.xpose.msra.mxu0 %v518
        %1286 = vmatprep.subr.mxu0 0.0
        %1287 = vmatpush2.xpose.msra.mxu0 %v515
        %1288 = vmatprep.subr.mxu0 0.0
        %1289 = vmatpush2.xpose.msra.mxu0 %v512
        %1290 = vmatprep.subr.mxu0 0.0
        %1291 = vmatpush2.xpose.msra.mxu0 %v509
        %1292 = vmatprep.mubr.f32.mxu0 0.0
        %1293 = vmatmul.mubr.f32.gmra.mxu0 %v458
        %v1294 = vpop.f32.mrf.mxu0
        %v1295 = vadd.f32 %v455, %v1294
        %v1296 = vpop.f32.mrf.mxu0
        %v1297 = vadd.f32 %v455, %v1296
        %1298 = vdwg.mxu0
        %1299 = vmatprep.subr.mxu0 0.0
        %1300 = vmatpush1.xpose.msra.mxu0 %v602
        %1301 = vmatprep.subr.mxu0 0.0
        %1302 = vmatpush1.xpose.msra.mxu0 %v599
        %1303 = vmatprep.subr.mxu0 0.0
        %1304 = vmatpush1.xpose.msra.mxu0 %v596
        %1305 = vmatprep.subr.mxu0 0.0
        %1306 = vmatpush1.xpose.msra.mxu0 %v593
        %1307 = vmatprep.subr.mxu0 0.0
        %1308 = vmatpush1.xpose.msra.mxu0 %v590
        %1309 = vmatprep.subr.mxu0 0.0
        %1310 = vmatpush1.xpose.msra.mxu0 %v587
        %1311 = vmatprep.subr.mxu0 0.0
        %1312 = vmatpush1.xpose.msra.mxu0 %v584
        %1313 = vmatprep.subr.mxu0 0.0
        %1314 = vmatpush1.xpose.msra.mxu0 %v581
        %1315 = vmatprep.subr.mxu0 0.0
        %1316 = vmatpush1.xpose.msra.mxu0 %v578
        %1317 = vmatprep.subr.mxu0 0.0
        %1318 = vmatpush1.xpose.msra.mxu0 %v575
        %1319 = vmatprep.subr.mxu0 0.0
        %1320 = vmatpush1.xpose.msra.mxu0 %v572
        %1321 = vmatprep.subr.mxu0 0.0
        %1322 = vmatpush1.xpose.msra.mxu0 %v569
        %1323 = vmatprep.subr.mxu0 0.0
        %1324 = vmatpush1.xpose.msra.mxu0 %v566
        %1325 = vmatprep.subr.mxu0 0.0
        %1326 = vmatpush1.xpose.msra.mxu0 %v563
        %1327 = vmatprep.subr.mxu0 0.0
        %1328 = vmatpush1.xpose.msra.mxu0 %v560
        %1329 = vmatprep.subr.mxu0 0.0
        %1330 = vmatpush1.xpose.msra.mxu0 %v557
        %1331 = vmatprep.subr.mxu0 0.0
        %1332 = vmatpush2.xpose.msra.mxu0 %v650
        %1333 = vmatprep.subr.mxu0 0.0
        %1334 = vmatpush2.xpose.msra.mxu0 %v647
        %1335 = vmatprep.subr.mxu0 0.0
        %1336 = vmatpush2.xpose.msra.mxu0 %v644
        %1337 = vmatprep.subr.mxu0 0.0
        %1338 = vmatpush2.xpose.msra.mxu0 %v641
        %1339 = vmatprep.subr.mxu0 0.0
        %1340 = vmatpush2.xpose.msra.mxu0 %v638
        %1341 = vmatprep.subr.mxu0 0.0
        %1342 = vmatpush2.xpose.msra.mxu0 %v635
        %1343 = vmatprep.subr.mxu0 0.0
        %1344 = vmatpush2.xpose.msra.mxu0 %v632
        %1345 = vmatprep.subr.mxu0 0.0
        %1346 = vmatpush2.xpose.msra.mxu0 %v629
        %1347 = vmatprep.subr.mxu0 0.0
        %1348 = vmatpush2.xpose.msra.mxu0 %v626
        %1349 = vmatprep.subr.mxu0 0.0
        %1350 = vmatpush2.xpose.msra.mxu0 %v623
        %1351 = vmatprep.subr.mxu0 0.0
        %1352 = vmatpush2.xpose.msra.mxu0 %v620
        %1353 = vmatprep.subr.mxu0 0.0
        %1354 = vmatpush2.xpose.msra.mxu0 %v617
        %1355 = vmatprep.subr.mxu0 0.0
        %1356 = vmatpush2.xpose.msra.mxu0 %v614
        %1357 = vmatprep.subr.mxu0 0.0
        %1358 = vmatpush2.xpose.msra.mxu0 %v611
        %1359 = vmatprep.subr.mxu0 0.0
        %1360 = vmatpush2.xpose.msra.mxu0 %v608
        %1361 = vmatprep.subr.mxu0 0.0
        %1362 = vmatpush2.xpose.msra.mxu0 %v605
        %1363 = vmatprep.mubr.f32.mxu0 0.0
        %1364 = vmatmul.mubr.f32.gmra.mxu0 %v458
        %v1365 = vpop.f32.mrf.mxu0
        %v1366 = vadd.f32 %v455, %v1365
        %v1367 = vpop.f32.mrf.mxu0
        %v1368 = vadd.f32 %v455, %v1367
        %1369 = vdwg.mxu0
        %1370 = vmatprep.subr.mxu0 0.0
        %1371 = vmatpush1.xpose.msra.mxu0 %v698
        %1372 = vmatprep.subr.mxu0 0.0
        %1373 = vmatpush1.xpose.msra.mxu0 %v695
        %1374 = vmatprep.subr.mxu0 0.0
        %1375 = vmatpush1.xpose.msra.mxu0 %v692
        %1376 = vmatprep.subr.mxu0 0.0
        %1377 = vmatpush1.xpose.msra.mxu0 %v689
        %1378 = vmatprep.subr.mxu0 0.0
        %1379 = vmatpush1.xpose.msra.mxu0 %v686
        %1380 = vmatprep.subr.mxu0 0.0
        %1381 = vmatpush1.xpose.msra.mxu0 %v683
        %1382 = vmatprep.subr.mxu0 0.0
        %1383 = vmatpush1.xpose.msra.mxu0 %v680
        %1384 = vmatprep.subr.mxu0 0.0
        %1385 = vmatpush1.xpose.msra.mxu0 %v677
        %1386 = vmatprep.subr.mxu0 0.0
        %1387 = vmatpush1.xpose.msra.mxu0 %v674
        %1388 = vmatprep.subr.mxu0 0.0
        %1389 = vmatpush1.xpose.msra.mxu0 %v671
        %1390 = vmatprep.subr.mxu0 0.0
        %1391 = vmatpush1.xpose.msra.mxu0 %v668
        %1392 = vmatprep.subr.mxu0 0.0
        %1393 = vmatpush1.xpose.msra.mxu0 %v665
        %1394 = vmatprep.subr.mxu0 0.0
        %1395 = vmatpush1.xpose.msra.mxu0 %v662
        %1396 = vmatprep.subr.mxu0 0.0
        %1397 = vmatpush1.xpose.msra.mxu0 %v659
        %1398 = vmatprep.subr.mxu0 0.0
        %1399 = vmatpush1.xpose.msra.mxu0 %v656
        %1400 = vmatprep.subr.mxu0 0.0
        %1401 = vmatpush1.xpose.msra.mxu0 %v653
        %1402 = vmatprep.subr.mxu0 0.0
        %1403 = vmatpush2.xpose.msra.mxu0 %v746
        %1404 = vmatprep.subr.mxu0 0.0
        %1405 = vmatpush2.xpose.msra.mxu0 %v743
        %1406 = vmatprep.subr.mxu0 0.0
        %1407 = vmatpush2.xpose.msra.mxu0 %v740
        %1408 = vmatprep.subr.mxu0 0.0
        %1409 = vmatpush2.xpose.msra.mxu0 %v737
        %1410 = vmatprep.subr.mxu0 0.0
        %1411 = vmatpush2.xpose.msra.mxu0 %v734
        %1412 = vmatprep.subr.mxu0 0.0
        %1413 = vmatpush2.xpose.msra.mxu0 %v731
        %1414 = vmatprep.subr.mxu0 0.0
        %1415 = vmatpush2.xpose.msra.mxu0 %v728
        %1416 = vmatprep.subr.mxu0 0.0
        %1417 = vmatpush2.xpose.msra.mxu0 %v725
        %1418 = vmatprep.subr.mxu0 0.0
        %1419 = vmatpush2.xpose.msra.mxu0 %v722
        %1420 = vmatprep.subr.mxu0 0.0
        %1421 = vmatpush2.xpose.msra.mxu0 %v719
        %1422 = vmatprep.subr.mxu0 0.0
        %1423 = vmatpush2.xpose.msra.mxu0 %v716
        %1424 = vmatprep.subr.mxu0 0.0
        %1425 = vmatpush2.xpose.msra.mxu0 %v713
        %1426 = vmatprep.subr.mxu0 0.0
        %1427 = vmatpush2.xpose.msra.mxu0 %v710
        %1428 = vmatprep.subr.mxu0 0.0
        %1429 = vmatpush2.xpose.msra.mxu0 %v707
        %1430 = vmatprep.subr.mxu0 0.0
        %1431 = vmatpush2.xpose.msra.mxu0 %v704
        %1432 = vmatprep.subr.mxu0 0.0
        %1433 = vmatpush2.xpose.msra.mxu0 %v701
        %1434 = vmatprep.mubr.f32.mxu0 0.0
        %1435 = vmatmul.mubr.f32.gmra.mxu0 %v458
        %v1436 = vpop.f32.mrf.mxu0
        %v1437 = vadd.f32 %v455, %v1436
        %v1438 = vpop.f32.mrf.mxu0
        %v1439 = vadd.f32 %v455, %v1438
        %1440 = vdwg.mxu0
        %1441 = vmatprep.subr.mxu0 0.0
        %1442 = vmatpush1.xpose.msra.mxu0 %v794
        %1443 = vmatprep.subr.mxu0 0.0
        %1444 = vmatpush1.xpose.msra.mxu0 %v791
        %1445 = vmatprep.subr.mxu0 0.0
        %1446 = vmatpush1.xpose.msra.mxu0 %v788
        %1447 = vmatprep.subr.mxu0 0.0
        %1448 = vmatpush1.xpose.msra.mxu0 %v785
        %1449 = vmatprep.subr.mxu0 0.0
        %1450 = vmatpush1.xpose.msra.mxu0 %v782
        %1451 = vmatprep.subr.mxu0 0.0
        %1452 = vmatpush1.xpose.msra.mxu0 %v779
        %1453 = vmatprep.subr.mxu0 0.0
        %1454 = vmatpush1.xpose.msra.mxu0 %v776
        %1455 = vmatprep.subr.mxu0 0.0
        %1456 = vmatpush1.xpose.msra.mxu0 %v773
        %1457 = vmatprep.subr.mxu0 0.0
        %1458 = vmatpush1.xpose.msra.mxu0 %v770
        %1459 = vmatprep.subr.mxu0 0.0
        %1460 = vmatpush1.xpose.msra.mxu0 %v767
        %1461 = vmatprep.subr.mxu0 0.0
        %1462 = vmatpush1.xpose.msra.mxu0 %v764
        %1463 = vmatprep.subr.mxu0 0.0
        %1464 = vmatpush1.xpose.msra.mxu0 %v761
        %1465 = vmatprep.subr.mxu0 0.0
        %1466 = vmatpush1.xpose.msra.mxu0 %v758
        %1467 = vmatprep.subr.mxu0 0.0
        %1468 = vmatpush1.xpose.msra.mxu0 %v755
        %1469 = vmatprep.subr.mxu0 0.0
        %1470 = vmatpush1.xpose.msra.mxu0 %v752
        %1471 = vmatprep.subr.mxu0 0.0
        %1472 = vmatpush1.xpose.msra.mxu0 %v749
        %1473 = vmatprep.subr.mxu0 0.0
        %1474 = vmatpush2.xpose.msra.mxu0 %v842
        %1475 = vmatprep.subr.mxu0 0.0
        %1476 = vmatpush2.xpose.msra.mxu0 %v839
        %1477 = vmatprep.subr.mxu0 0.0
        %1478 = vmatpush2.xpose.msra.mxu0 %v836
        %1479 = vmatprep.subr.mxu0 0.0
        %1480 = vmatpush2.xpose.msra.mxu0 %v833
        %1481 = vmatprep.subr.mxu0 0.0
        %1482 = vmatpush2.xpose.msra.mxu0 %v830
        %1483 = vmatprep.subr.mxu0 0.0
        %1484 = vmatpush2.xpose.msra.mxu0 %v827
        %1485 = vmatprep.subr.mxu0 0.0
        %1486 = vmatpush2.xpose.msra.mxu0 %v824
        %1487 = vmatprep.subr.mxu0 0.0
        %1488 = vmatpush2.xpose.msra.mxu0 %v821
        %1489 = vmatprep.subr.mxu0 0.0
        %1490 = vmatpush2.xpose.msra.mxu0 %v818
        %1491 = vmatprep.subr.mxu0 0.0
        %1492 = vmatpush2.xpose.msra.mxu0 %v815
        %1493 = vmatprep.subr.mxu0 0.0
        %1494 = vmatpush2.xpose.msra.mxu0 %v812
        %1495 = vmatprep.subr.mxu0 0.0
        %1496 = vmatpush2.xpose.msra.mxu0 %v809
        %1497 = vmatprep.subr.mxu0 0.0
        %1498 = vmatpush2.xpose.msra.mxu0 %v806
        %1499 = vmatprep.subr.mxu0 0.0
        %1500 = vmatpush2.xpose.msra.mxu0 %v803
        %1501 = vmatprep.subr.mxu0 0.0
        %1502 = vmatpush2.xpose.msra.mxu0 %v800
        %1503 = vmatprep.subr.mxu0 0.0
        %1504 = vmatpush2.xpose.msra.mxu0 %v797
        %1505 = vmatprep.mubr.f32.mxu0 0.0
        %1506 = vmatmul.mubr.f32.gmra.mxu0 %v458
        %v1507 = vpop.f32.mrf.mxu0
        %v1508 = vadd.f32 %v455, %v1507
        %v1509 = vpop.f32.mrf.mxu0
        %v1510 = vadd.f32 %v455, %v1509
        %1511 = vdwg.mxu0
        %1512 = vmatprep.subr.mxu0 0.0
        %1513 = vmatpush1.xpose.msra.mxu0 %v890
        %1514 = vmatprep.subr.mxu0 0.0
        %1515 = vmatpush1.xpose.msra.mxu0 %v887
        %1516 = vmatprep.subr.mxu0 0.0
        %1517 = vmatpush1.xpose.msra.mxu0 %v884
        %1518 = vmatprep.subr.mxu0 0.0
        %1519 = vmatpush1.xpose.msra.mxu0 %v881
        %1520 = vmatprep.subr.mxu0 0.0
        %1521 = vmatpush1.xpose.msra.mxu0 %v878
        %1522 = vmatprep.subr.mxu0 0.0
        %1523 = vmatpush1.xpose.msra.mxu0 %v875
        %1524 = vmatprep.subr.mxu0 0.0
        %1525 = vmatpush1.xpose.msra.mxu0 %v872
        %1526 = vmatprep.subr.mxu0 0.0
        %1527 = vmatpush1.xpose.msra.mxu0 %v869
        %1528 = vmatprep.subr.mxu0 0.0
        %1529 = vmatpush1.xpose.msra.mxu0 %v866
        %1530 = vmatprep.subr.mxu0 0.0
        %1531 = vmatpush1.xpose.msra.mxu0 %v863
        %1532 = vmatprep.subr.mxu0 0.0
        %1533 = vmatpush1.xpose.msra.mxu0 %v860
        %1534 = vmatprep.subr.mxu0 0.0
        %1535 = vmatpush1.xpose.msra.mxu0 %v857
        %1536 = vmatprep.subr.mxu0 0.0
        %1537 = vmatpush1.xpose.msra.mxu0 %v854
        %1538 = vmatprep.subr.mxu0 0.0
        %1539 = vmatpush1.xpose.msra.mxu0 %v851
        %1540 = vmatprep.subr.mxu0 0.0
        %1541 = vmatpush1.xpose.msra.mxu0 %v848
        %1542 = vmatprep.subr.mxu0 0.0
        %1543 = vmatpush1.xpose.msra.mxu0 %v845
        %1544 = vmatprep.subr.mxu0 0.0
        %1545 = vmatpush2.xpose.msra.mxu0 %v938
        %1546 = vmatprep.subr.mxu0 0.0
        %1547 = vmatpush2.xpose.msra.mxu0 %v935
        %1548 = vmatprep.subr.mxu0 0.0
        %1549 = vmatpush2.xpose.msra.mxu0 %v932
        %1550 = vmatprep.subr.mxu0 0.0
        %1551 = vmatpush2.xpose.msra.mxu0 %v929
        %1552 = vmatprep.subr.mxu0 0.0
        %1553 = vmatpush2.xpose.msra.mxu0 %v926
        %1554 = vmatprep.subr.mxu0 0.0
        %1555 = vmatpush2.xpose.msra.mxu0 %v923
        %1556 = vmatprep.subr.mxu0 0.0
        %1557 = vmatpush2.xpose.msra.mxu0 %v920
        %1558 = vmatprep.subr.mxu0 0.0
        %1559 = vmatpush2.xpose.msra.mxu0 %v917
        %1560 = vmatprep.subr.mxu0 0.0
        %1561 = vmatpush2.xpose.msra.mxu0 %v914
        %1562 = vmatprep.subr.mxu0 0.0
        %1563 = vmatpush2.xpose.msra.mxu0 %v911
        %1564 = vmatprep.subr.mxu0 0.0
        %1565 = vmatpush2.xpose.msra.mxu0 %v908
        %1566 = vmatprep.subr.mxu0 0.0
        %1567 = vmatpush2.xpose.msra.mxu0 %v905
        %1568 = vmatprep.subr.mxu0 0.0
        %1569 = vmatpush2.xpose.msra.mxu0 %v902
        %1570 = vmatprep.subr.mxu0 0.0
        %1571 = vmatpush2.xpose.msra.mxu0 %v899
        %1572 = vmatprep.subr.mxu0 0.0
        %1573 = vmatpush2.xpose.msra.mxu0 %v896
        %1574 = vmatprep.subr.mxu0 0.0
        %1575 = vmatpush2.xpose.msra.mxu0 %v893
        %1576 = vmatprep.mubr.f32.mxu0 0.0
        %1577 = vmatmul.mubr.f32.gmra.mxu0 %v458
        %v1578 = vpop.f32.mrf.mxu0
        %v1579 = vadd.f32 %v455, %v1578
        %v1580 = vpop.f32.mrf.mxu0
        %v1581 = vadd.f32 %v455, %v1580
        %1582 = vdwg.mxu0
        %1583 = vmatprep.subr.mxu0 0.0
        %1584 = vmatpush1.xpose.msra.mxu0 %v986
        %1585 = vmatprep.subr.mxu0 0.0
        %1586 = vmatpush1.xpose.msra.mxu0 %v983
        %1587 = vmatprep.subr.mxu0 0.0
        %1588 = vmatpush1.xpose.msra.mxu0 %v980
        %1589 = vmatprep.subr.mxu0 0.0
        %1590 = vmatpush1.xpose.msra.mxu0 %v977
        %1591 = vmatprep.subr.mxu0 0.0
        %1592 = vmatpush1.xpose.msra.mxu0 %v974
        %1593 = vmatprep.subr.mxu0 0.0
        %1594 = vmatpush1.xpose.msra.mxu0 %v971
        %1595 = vmatprep.subr.mxu0 0.0
        %1596 = vmatpush1.xpose.msra.mxu0 %v968
        %1597 = vmatprep.subr.mxu0 0.0
        %1598 = vmatpush1.xpose.msra.mxu0 %v965
        %1599 = vmatprep.subr.mxu0 0.0
        %1600 = vmatpush1.xpose.msra.mxu0 %v962
        %1601 = vmatprep.subr.mxu0 0.0
        %1602 = vmatpush1.xpose.msra.mxu0 %v959
        %1603 = vmatprep.subr.mxu0 0.0
        %1604 = vmatpush1.xpose.msra.mxu0 %v956
        %1605 = vmatprep.subr.mxu0 0.0
        %1606 = vmatpush1.xpose.msra.mxu0 %v953
        %1607 = vmatprep.subr.mxu0 0.0
        %1608 = vmatpush1.xpose.msra.mxu0 %v950
        %1609 = vmatprep.subr.mxu0 0.0
        %1610 = vmatpush1.xpose.msra.mxu0 %v947
        %1611 = vmatprep.subr.mxu0 0.0
        %1612 = vmatpush1.xpose.msra.mxu0 %v944
        %1613 = vmatprep.subr.mxu0 0.0
        %1614 = vmatpush1.xpose.msra.mxu0 %v941
        %1615 = vmatprep.subr.mxu0 0.0
        %1616 = vmatpush2.xpose.msra.mxu0 %v1034
        %1617 = vmatprep.subr.mxu0 0.0
        %1618 = vmatpush2.xpose.msra.mxu0 %v1031
        %1619 = vmatprep.subr.mxu0 0.0
        %1620 = vmatpush2.xpose.msra.mxu0 %v1028
        %1621 = vmatprep.subr.mxu0 0.0
        %1622 = vmatpush2.xpose.msra.mxu0 %v1025
        %1623 = vmatprep.subr.mxu0 0.0
        %1624 = vmatpush2.xpose.msra.mxu0 %v1022
        %1625 = vmatprep.subr.mxu0 0.0
        %1626 = vmatpush2.xpose.msra.mxu0 %v1019
        %1627 = vmatprep.subr.mxu0 0.0
        %1628 = vmatpush2.xpose.msra.mxu0 %v1016
        %1629 = vmatprep.subr.mxu0 0.0
        %1630 = vmatpush2.xpose.msra.mxu0 %v1013
        %1631 = vmatprep.subr.mxu0 0.0
        %1632 = vmatpush2.xpose.msra.mxu0 %v1010
        %1633 = vmatprep.subr.mxu0 0.0
        %1634 = vmatpush2.xpose.msra.mxu0 %v1007
        %1635 = vmatprep.subr.mxu0 0.0
        %1636 = vmatpush2.xpose.msra.mxu0 %v1004
        %1637 = vmatprep.subr.mxu0 0.0
        %1638 = vmatpush2.xpose.msra.mxu0 %v1001
        %1639 = vmatprep.subr.mxu0 0.0
        %1640 = vmatpush2.xpose.msra.mxu0 %v998
        %1641 = vmatprep.subr.mxu0 0.0
        %1642 = vmatpush2.xpose.msra.mxu0 %v995
        %1643 = vmatprep.subr.mxu0 0.0
        %1644 = vmatpush2.xpose.msra.mxu0 %v992
        %1645 = vmatprep.subr.mxu0 0.0
        %1646 = vmatpush2.xpose.msra.mxu0 %v989
        %1647 = vmatprep.mubr.f32.mxu0 0.0
        %1648 = vmatmul.mubr.f32.gmra.mxu0 %v458
        %v1649 = vpop.f32.mrf.mxu0
        %v1650 = vadd.f32 %v455, %v1649
        %v1651 = vpop.f32.mrf.mxu0
        %v1652 = vadd.f32 %v455, %v1651
        %1653 = vdwg.mxu0
        %1654 = vmatprep.subr.mxu0 0.0
        %1655 = vmatpush1.xpose.msra.mxu0 %v1082
        %1656 = vmatprep.subr.mxu0 0.0
        %1657 = vmatpush1.xpose.msra.mxu0 %v1079
        %1658 = vmatprep.subr.mxu0 0.0
        %1659 = vmatpush1.xpose.msra.mxu0 %v1076
        %1660 = vmatprep.subr.mxu0 0.0
        %1661 = vmatpush1.xpose.msra.mxu0 %v1073
        %1662 = vmatprep.subr.mxu0 0.0
        %1663 = vmatpush1.xpose.msra.mxu0 %v1070
        %1664 = vmatprep.subr.mxu0 0.0
        %1665 = vmatpush1.xpose.msra.mxu0 %v1067
        %1666 = vmatprep.subr.mxu0 0.0
        %1667 = vmatpush1.xpose.msra.mxu0 %v1064
        %1668 = vmatprep.subr.mxu0 0.0
        %1669 = vmatpush1.xpose.msra.mxu0 %v1061
        %1670 = vmatprep.subr.mxu0 0.0
        %1671 = vmatpush1.xpose.msra.mxu0 %v1058
        %1672 = vmatprep.subr.mxu0 0.0
        %1673 = vmatpush1.xpose.msra.mxu0 %v1055
        %1674 = vmatprep.subr.mxu0 0.0
        %1675 = vmatpush1.xpose.msra.mxu0 %v1052
        %1676 = vmatprep.subr.mxu0 0.0
        %1677 = vmatpush1.xpose.msra.mxu0 %v1049
        %1678 = vmatprep.subr.mxu0 0.0
        %1679 = vmatpush1.xpose.msra.mxu0 %v1046
        %1680 = vmatprep.subr.mxu0 0.0
        %1681 = vmatpush1.xpose.msra.mxu0 %v1043
        %1682 = vmatprep.subr.mxu0 0.0
        %1683 = vmatpush1.xpose.msra.mxu0 %v1040
        %1684 = vmatprep.subr.mxu0 0.0
        %1685 = vmatpush1.xpose.msra.mxu0 %v1037
        %1686 = vmatprep.subr.mxu0 0.0
        %1687 = vmatpush2.xpose.msra.mxu0 %v1130
        %1688 = vmatprep.subr.mxu0 0.0
        %1689 = vmatpush2.xpose.msra.mxu0 %v1127
        %1690 = vmatprep.subr.mxu0 0.0
        %1691 = vmatpush2.xpose.msra.mxu0 %v1124
        %1692 = vmatprep.subr.mxu0 0.0
        %1693 = vmatpush2.xpose.msra.mxu0 %v1121
        %1694 = vmatprep.subr.mxu0 0.0
        %1695 = vmatpush2.xpose.msra.mxu0 %v1118
        %1696 = vmatprep.subr.mxu0 0.0
        %1697 = vmatpush2.xpose.msra.mxu0 %v1115
        %1698 = vmatprep.subr.mxu0 0.0
        %1699 = vmatpush2.xpose.msra.mxu0 %v1112
        %1700 = vmatprep.subr.mxu0 0.0
        %1701 = vmatpush2.xpose.msra.mxu0 %v1109
        %1702 = vmatprep.subr.mxu0 0.0
        %1703 = vmatpush2.xpose.msra.mxu0 %v1106
        %1704 = vmatprep.subr.mxu0 0.0
        %1705 = vmatpush2.xpose.msra.mxu0 %v1103
        %1706 = vmatprep.subr.mxu0 0.0
        %1707 = vmatpush2.xpose.msra.mxu0 %v1100
        %1708 = vmatprep.subr.mxu0 0.0
        %1709 = vmatpush2.xpose.msra.mxu0 %v1097
        %1710 = vmatprep.subr.mxu0 0.0
        %1711 = vmatpush2.xpose.msra.mxu0 %v1094
        %1712 = vmatprep.subr.mxu0 0.0
        %1713 = vmatpush2.xpose.msra.mxu0 %v1091
        %1714 = vmatprep.subr.mxu0 0.0
        %1715 = vmatpush2.xpose.msra.mxu0 %v1088
        %1716 = vmatprep.subr.mxu0 0.0
        %1717 = vmatpush2.xpose.msra.mxu0 %v1085
        %1718 = vmatprep.mubr.f32.mxu0 0.0
        %1719 = vmatmul.mubr.f32.gmra.mxu0 %v458
        %v1720 = vpop.f32.mrf.mxu0
        %v1721 = vadd.f32 %v455, %v1720
        %v1722 = vpop.f32.mrf.mxu0
        %v1723 = vadd.f32 %v455, %v1722
        %1724 = vdwg.mxu0
        %1725 = vmatprep.subr.mxu0 0.0
        %1726 = vmatpush1.xpose.msra.mxu0 %v1178
        %1727 = vmatprep.subr.mxu0 0.0
        %1728 = vmatpush1.xpose.msra.mxu0 %v1175
        %1729 = vmatprep.subr.mxu0 0.0
        %1730 = vmatpush1.xpose.msra.mxu0 %v1172
        %1731 = vmatprep.subr.mxu0 0.0
        %1732 = vmatpush1.xpose.msra.mxu0 %v1169
        %1733 = vmatprep.subr.mxu0 0.0
        %1734 = vmatpush1.xpose.msra.mxu0 %v1166
        %1735 = vmatprep.subr.mxu0 0.0
        %1736 = vmatpush1.xpose.msra.mxu0 %v1163
        %1737 = vmatprep.subr.mxu0 0.0
        %1738 = vmatpush1.xpose.msra.mxu0 %v1160
        %1739 = vmatprep.subr.mxu0 0.0
        %1740 = vmatpush1.xpose.msra.mxu0 %v1157
        %1741 = vmatprep.subr.mxu0 0.0
        %1742 = vmatpush1.xpose.msra.mxu0 %v1154
        %1743 = vmatprep.subr.mxu0 0.0
        %1744 = vmatpush1.xpose.msra.mxu0 %v1151
        %1745 = vmatprep.subr.mxu0 0.0
        %1746 = vmatpush1.xpose.msra.mxu0 %v1148
        %1747 = vmatprep.subr.mxu0 0.0
        %1748 = vmatpush1.xpose.msra.mxu0 %v1145
        %1749 = vmatprep.subr.mxu0 0.0
        %1750 = vmatpush1.xpose.msra.mxu0 %v1142
        %1751 = vmatprep.subr.mxu0 0.0
        %1752 = vmatpush1.xpose.msra.mxu0 %v1139
        %1753 = vmatprep.subr.mxu0 0.0
        %1754 = vmatpush1.xpose.msra.mxu0 %v1136
        %1755 = vmatprep.subr.mxu0 0.0
        %1756 = vmatpush1.xpose.msra.mxu0 %v1133
        %1757 = vmatprep.subr.mxu0 0.0
        %1758 = vmatpush2.xpose.msra.mxu0 %v1226
        %1759 = vmatprep.subr.mxu0 0.0
        %1760 = vmatpush2.xpose.msra.mxu0 %v1223
        %1761 = vmatprep.subr.mxu0 0.0
        %1762 = vmatpush2.xpose.msra.mxu0 %v1220
        %1763 = vmatprep.subr.mxu0 0.0
        %1764 = vmatpush2.xpose.msra.mxu0 %v1217
        %1765 = vmatprep.subr.mxu0 0.0
        %1766 = vmatpush2.xpose.msra.mxu0 %v1214
        %1767 = vmatprep.subr.mxu0 0.0
        %1768 = vmatpush2.xpose.msra.mxu0 %v1211
        %1769 = vmatprep.subr.mxu0 0.0
        %1770 = vmatpush2.xpose.msra.mxu0 %v1208
        %1771 = vmatprep.subr.mxu0 0.0
        %1772 = vmatpush2.xpose.msra.mxu0 %v1205
        %1773 = vmatprep.subr.mxu0 0.0
        %1774 = vmatpush2.xpose.msra.mxu0 %v1202
        %1775 = vmatprep.subr.mxu0 0.0
        %1776 = vmatpush2.xpose.msra.mxu0 %v1199
        %1777 = vmatprep.subr.mxu0 0.0
        %1778 = vmatpush2.xpose.msra.mxu0 %v1196
        %1779 = vmatprep.subr.mxu0 0.0
        %1780 = vmatpush2.xpose.msra.mxu0 %v1193
        %1781 = vmatprep.subr.mxu0 0.0
        %1782 = vmatpush2.xpose.msra.mxu0 %v1190
        %1783 = vmatprep.subr.mxu0 0.0
        %1784 = vmatpush2.xpose.msra.mxu0 %v1187
        %1785 = vmatprep.subr.mxu0 0.0
        %1786 = vmatpush2.xpose.msra.mxu0 %v1184
        %1787 = vmatprep.subr.mxu0 0.0
        %1788 = vmatpush2.xpose.msra.mxu0 %v1181
        %1789 = vmatprep.mubr.f32.mxu0 0.0
        %1790 = vmatmul.mubr.f32.gmra.mxu0 %v458
        %v1791 = vpop.f32.mrf.mxu0
        %v1792 = vadd.f32 %v455, %v1791
        %v1793 = vpop.f32.mrf.mxu0
        %v1794 = vadd.f32 %v455, %v1793
        %1795 = vdwg.mxu0
        %v1796 = vxor.u32 %v1295, 2147483648
        %v1797 = vxor.u32 %v1297, 2147483648
        %v1798 = vxor.u32 %v1366, 2147483648
        %v1799 = vxor.u32 %v1368, 2147483648
        %v1800 = vxor.u32 %v1437, 2147483648
        %v1801 = vxor.u32 %v1439, 2147483648
        %v1802 = vxor.u32 %v1508, 2147483648
        %v1803 = vxor.u32 %v1510, 2147483648
        %v1804 = vxor.u32 %v1579, 2147483648
        %v1805 = vxor.u32 %v1581, 2147483648
        %v1806 = vxor.u32 %v1650, 2147483648
        %v1807 = vxor.u32 %v1652, 2147483648
        %v1808 = vxor.u32 %v1721, 2147483648
        %v1809 = vxor.u32 %v1723, 2147483648
        %v1810 = vxor.u32 %v1792, 2147483648
        %v1811 = vxor.u32 %v1794, 2147483648
        %v1812 = vmul.f32 %v1796, 1.442695
        %v1813 = vpow.pop %v1812
        %v1814 = vmul.f32 %v1797, 1.442695
        %v1815 = vpow.pop %v1814
        %v1816 = vmul.f32 %v1798, 1.442695
        %v1817 = vpow.pop %v1816
        %v1818 = vmul.f32 %v1799, 1.442695
        %v1819 = vpow.pop %v1818
        %v1820 = vmul.f32 %v1800, 1.442695
        %v1821 = vpow.pop %v1820
        %v1822 = vmul.f32 %v1801, 1.442695
        %v1823 = vpow.pop %v1822
        %v1824 = vmul.f32 %v1802, 1.442695
        %v1825 = vpow.pop %v1824
        %v1826 = vmul.f32 %v1803, 1.442695
        %v1827 = vpow.pop %v1826
        %v1828 = vmul.f32 %v1804, 1.442695
        %v1829 = vpow.pop %v1828
        %v1830 = vmul.f32 %v1805, 1.442695
        %v1831 = vpow.pop %v1830
        %v1832 = vmul.f32 %v1806, 1.442695
        %v1833 = vpow.pop %v1832
        %v1834 = vmul.f32 %v1807, 1.442695
        %v1835 = vpow.pop %v1834
        %v1836 = vmul.f32 %v1808, 1.442695
        %v1837 = vpow.pop %v1836
        %v1838 = vmul.f32 %v1809, 1.442695
        %v1839 = vpow.pop %v1838
        %v1840 = vmul.f32 %v1810, 1.442695
        %v1841 = vpow.pop %v1840
        %v1842 = vmul.f32 %v1811, 1.442695
        %v1843 = vpow.pop %v1842
        %v1844 = vadd.f32 %v1813, 1.0
        %v1845 = vadd.f32 %v1815, 1.0
        %v1846 = vadd.f32 %v1817, 1.0
        %v1847 = vadd.f32 %v1819, 1.0
        %v1848 = vadd.f32 %v1821, 1.0
        %v1849 = vadd.f32 %v1823, 1.0
        %v1850 = vadd.f32 %v1825, 1.0
        %v1851 = vadd.f32 %v1827, 1.0
        %v1852 = vadd.f32 %v1829, 1.0
        %v1853 = vadd.f32 %v1831, 1.0
        %v1854 = vadd.f32 %v1833, 1.0
        %v1855 = vadd.f32 %v1835, 1.0
        %v1856 = vadd.f32 %v1837, 1.0
        %v1857 = vadd.f32 %v1839, 1.0
        %v1858 = vadd.f32 %v1841, 1.0
        %v1859 = vadd.f32 %v1843, 1.0
        %v1860 = vrcp.pop %v1844
        %v1861 = vmul.f32 1.0, %v1860
        %v1862 = vrcp.pop %v1845
        %v1863 = vmul.f32 1.0, %v1862
        %v1864 = vrcp.pop %v1846
        %v1865 = vmul.f32 1.0, %v1864
        %v1866 = vrcp.pop %v1847
        %v1867 = vmul.f32 1.0, %v1866
        %v1868 = vrcp.pop %v1848
        %v1869 = vmul.f32 1.0, %v1868
        %v1870 = vrcp.pop %v1849
        %v1871 = vmul.f32 1.0, %v1870
        %v1872 = vrcp.pop %v1850
        %v1873 = vmul.f32 1.0, %v1872
        %v1874 = vrcp.pop %v1851
        %v1875 = vmul.f32 1.0, %v1874
        %v1876 = vrcp.pop %v1852
        %v1877 = vmul.f32 1.0, %v1876
        %v1878 = vrcp.pop %v1853
        %v1879 = vmul.f32 1.0, %v1878
        %v1880 = vrcp.pop %v1854
        %v1881 = vmul.f32 1.0, %v1880
        %v1882 = vrcp.pop %v1855
        %v1883 = vmul.f32 1.0, %v1882
        %v1884 = vrcp.pop %v1856
        %v1885 = vmul.f32 1.0, %v1884
        %v1886 = vrcp.pop %v1857
        %v1887 = vmul.f32 1.0, %v1886
        %v1888 = vrcp.pop %v1858
        %v1889 = vmul.f32 1.0, %v1888
        %v1890 = vrcp.pop %v1859
        %v1891 = vmul.f32 1.0, %v1890
        %v1908 = vcombine.low %v1861, %v1863
        %v1909 = vcombine.low %v1865, %v1867
        %v1910 = vcombine.low %v1869, %v1871
        %v1911 = vcombine.low %v1873, %v1875
        %v1913 = vunpack.c.l.s4 1966171168
        %v1914 = vunpack.c.0.s8 %v1913
        %v1915 = vlaneseq
        %v1916 = vshrl.u32 %v1915, 7
        %v1917 = vsub.s32 %v1914, %v1916
        %v1918 = vrot.slane %v1908, %v1917
        %v1920 = vunpack.c.l.s4 1966171168
        %v1921 = vunpack.c.0.s8 %v1920
        %v1922 = vlaneseq
        %v1923 = vshrl.u32 %v1922, 7
        %v1924 = vsub.s32 %v1921, %v1923
        %v1925 = vrot.slane %v1909, %v1924
        %v1927 = vunpack.c.l.s4 1966171168
        %v1928 = vunpack.c.0.s8 %v1927
        %v1929 = vlaneseq
        %v1930 = vshrl.u32 %v1929, 7
        %v1931 = vsub.s32 %v1928, %v1930
        %v1932 = vrot.slane %v1910, %v1931
        %v1934 = vunpack.c.l.s4 1966171168
        %v1935 = vunpack.c.0.s8 %v1934
        %v1936 = vlaneseq
        %v1937 = vshrl.u32 %v1936, 7
        %v1938 = vsub.s32 %v1935, %v1937
        %v1939 = vrot.slane %v1911, %v1938
        %v1940 = vcombine.low %v1918, %v1925
        %v1941 = vcombine.low %v1932, %v1939
        %v1943 = vunpack.c.l.s4 1966171168
        %v1944 = vunpack.c.0.s8 %v1943
        %v1945 = vlaneseq
        %v1946 = vshrl.u32 %v1945, 7
        %v1947 = vsub.s32 %v1944, %v1946
        %v1948 = vrot.slane %v1940, %v1947
        %v1950 = vunpack.c.l.s4 1966171168
        %v1951 = vunpack.c.0.s8 %v1950
        %v1952 = vlaneseq
        %v1953 = vshrl.u32 %v1952, 7
        %v1954 = vsub.s32 %v1951, %v1953
        %v1955 = vrot.slane %v1941, %v1954
        %v1956 = vcombine.low %v1948, %v1955
        %v1957 = vcombine.low %v1877, %v1879
        %v1958 = vcombine.low %v1881, %v1883
        %v1959 = vcombine.low %v1885, %v1887
        %v1960 = vcombine.low %v1889, %v1891
        %v1962 = vunpack.c.l.s4 1966171168
        %v1963 = vunpack.c.0.s8 %v1962
        %v1964 = vlaneseq
        %v1965 = vshrl.u32 %v1964, 7
        %v1966 = vsub.s32 %v1963, %v1965
        %v1967 = vrot.slane %v1957, %v1966
        %v1969 = vunpack.c.l.s4 1966171168
        %v1970 = vunpack.c.0.s8 %v1969
        %v1971 = vlaneseq
        %v1972 = vshrl.u32 %v1971, 7
        %v1973 = vsub.s32 %v1970, %v1972
        %v1974 = vrot.slane %v1958, %v1973
        %v1976 = vunpack.c.l.s4 1966171168
        %v1977 = vunpack.c.0.s8 %v1976
        %v1978 = vlaneseq
        %v1979 = vshrl.u32 %v1978, 7
        %v1980 = vsub.s32 %v1977, %v1979
        %v1981 = vrot.slane %v1959, %v1980
        %v1983 = vunpack.c.l.s4 1966171168
        %v1984 = vunpack.c.0.s8 %v1983
        %v1985 = vlaneseq
        %v1986 = vshrl.u32 %v1985, 7
        %v1987 = vsub.s32 %v1984, %v1986
        %v1988 = vrot.slane %v1960, %v1987
        %v1989 = vcombine.low %v1967, %v1974
        %v1990 = vcombine.low %v1981, %v1988
        %v1992 = vunpack.c.l.s4 1966171168
        %v1993 = vunpack.c.0.s8 %v1992
        %v1994 = vlaneseq
        %v1995 = vshrl.u32 %v1994, 7
        %v1996 = vsub.s32 %v1993, %v1995
        %v1997 = vrot.slane %v1989, %v1996
        %v1999 = vunpack.c.l.s4 1966171168
        %v2000 = vunpack.c.0.s8 %v1999
        %v2001 = vlaneseq
        %v2002 = vshrl.u32 %v2001, 7
        %v2003 = vsub.s32 %v2000, %v2002
        %v2004 = vrot.slane %v1990, %v2003
        %v2005 = vcombine.low %v1997, %v2004
        %2008 = vst [vmem:[%s177] sm:$0xff] %v1956
        %2009 = vst [vmem:[%s177 + $0x8] sm:$0xff] %v2005
        %s2010 = sand.u32 %s94, 1
        %s2011 = scalar_lea.sflag [#allocation4], %s2010
        %s2012 = sand.u32 %s94, 1
        %s2013 = smul.addr %s2012, 16
        %s2014 = scalar_lea.vmem [#allocation3], %s2013
        // Predicated region
        $region33: #{tpu_custom_call.1} parent=31 // pred_check
          %p2015 = pneg %p104
        $region34: #{tpu_custom_call.1} parent=31 // pred_check_branch
          %2017 = sbr.rel (%p2015) target = $region36
        $region35: #{tpu_custom_call.1} parent=31 // pred_region
          %s2018 = smul.u32 16, %s18
          %s2019 = ssub.s32 33, %s2018
          %p2020 = scmp.lt.s32.totalorder %s2019, 16
          %s2021 = scalar_select %p2020, %s2019, 16
          %s2022 = smul.u32 16, %s2021
          %s2024 = ssub.s32 256, %s2022
          %2025 = vsyncadd %s2011, %s2024
          %p2026 = scmp.ne.s32.totalorder 0, %s2022
          %s2027 = smul.addr %s2018, 16
          %s2028 = scalar_lea.hbm %s3, %s2027
          %s2029 = sshll.u32 %s2021, 4
          %s2030 = sshll.u32 %s2014, 4
          %s2031 = int_to_ptr.vmem [resolvable:$true] %s2030
          %2033 = dma.vmem_to_hbm [thread:$0]  (%p2026), %s2031, %s2029, %s2028, %s2011
        $region36: #{tpu_custom_call.1} parent=31 // pred_fallthru
          _
      $region32: #{tpu_custom_call.1} parent=5 // pred_fallthru
        _
      %p2034 = scmp.le.s32.totalorder 2, %s13
      // Predicated region
      $region37: #{tpu_custom_call.1} parent=5 // pred_check
        %p2035 = pneg %p2034
      $region38: #{tpu_custom_call.1} parent=5 // pred_check_branch
        %2037 = sbr.rel (%p2035) target = $region40
      $region39: #{tpu_custom_call.1} parent=5 // pred_region
        %s2038 = ssub.s32 %s13, 2
        // Predicated region
        $region41: #{tpu_custom_call.1} parent=39 // pred_check
          %p2039 = pneg %p110
        $region42: #{tpu_custom_call.1} parent=39 // pred_check_branch
          %2041 = sbr.rel (%p2039) target = $region44
        $region43: #{tpu_custom_call.1} parent=39 // pred_region
          %s2042 = sand.u32 %s95, 1
          %s2043 = scalar_lea.sflag [#allocation4], %s2042
          %s2044 = sand.u32 %s95, 1
          %s2045 = smul.addr %s2044, 16
          %s2046 = scalar_lea.vmem [#allocation3], %s2045
          %2047 = dma.done %s2043, 256
        $region44: #{tpu_custom_call.1} parent=39 // pred_fallthru
          _
      $region40: #{tpu_custom_call.1} parent=5 // pred_fallthru
        _
    $region6: #{tpu_custom_call.1} parent=1 // loop_footer
      %s17 = sadd.s32 1, %s13
    $region7: #{tpu_custom_call.1} parent=1 // loop_footer_branch
      %12 = sbr.rel target = $region3
    $region8: #{tpu_custom_call.1} parent=1 // loop_exit
      _
    %2048 = vsyncpa [#allocation4], 1
    %s2049 = scalar_lea.sflag [#allocation4], 1
    %2050 = vsyncpa %s2049, 1

</llo_original>
